<compile_context>
chip_gen: v5e
topology: v5e:2x2
jax: 0.10.0
libtpu: 0.0.40
codegen_flags: <defaults>
</compile_context>

<pallas_src>
import math
import numpy as np
import jax
import jax.numpy as jnp
from jax import lax
from jax.experimental import pallas as pl
from jax.experimental.pallas import tpu as pltpu


def _round_up(x, m):
    return ((x + m - 1) // m) * m


def make_encoder_kernel(num_layers, t_eff, batch, hidden, b_star, unroll):
    """Builds the Pallas kernel. All loop bounds / indices are static Python ints."""
    H = hidden

    def kernel(*refs):
        feat_ref = refs[0]                                    # (t_eff*B, F) f32, time-major rows
        layer_refs = refs[1:1 + 3 * num_layers]               # (w_ih, w_hh, b) per layer
        w_lin_ref = refs[1 + 3 * num_layers]                  # (H, Vpad)
        b_lin_ref = refs[2 + 3 * num_layers]                  # (1, Vpad)
        out_ref = refs[3 + 3 * num_layers]                    # (1, Vpad)
        gates_ref = refs[4 + 3 * num_layers]                  # VMEM (t_eff, B, 4H)
        hbuf_ref = refs[5 + 3 * num_layers]                   # VMEM (t_eff|1, B, H)

        h_top = None
        for l in range(num_layers):
            w_ih = layer_refs[3 * l][...]                     # (in_dim, 4H)
            w_hh = layer_refs[3 * l + 1][...]                 # (H, 4H)
            b = layer_refs[3 * l + 2][...]                    # (1, 4H)

            # ---- Hoisted input projection: one batched MXU matmul for ALL timesteps. ----
            if l == 0:
                x_all = feat_ref[...]                         # (t_eff*B, F)
            else:
                x_all = hbuf_ref[...].reshape(t_eff * batch, H)
            gates_pre = jnp.dot(x_all, w_ih, preferred_element_type=jnp.float32) + b
            gates_ref[...] = gates_pre.reshape(t_eff, batch, 4 * H)

            is_last = (l == num_layers - 1)

            def step(t, carry, _w_hh=w_hh, _is_last=is_last):
                h, c = carry
                # Recurrence critical path: only h @ W_hh + precomputed gates[t].
                g = gates_ref[t] + jnp.dot(h, _w_hh, preferred_element_type=jnp.float32)
                # Gate order [i, f, o, g] (permuted at init): one wide sigmoid + one tanh.
                act = jax.nn.sigmoid(g[:, :3 * H])
                i_g = act[:, :H]
                f_g = act[:, H:2 * H]
                o_g = act[:, 2 * H:3 * H]
                g_g = jnp.tanh(g[:, 3 * H:])
                c = f_g * c + i_g * g_g
                h = o_g * jnp.tanh(c)
                if not _is_last:
                    hbuf_ref[t] = h                           # next layer's input (time-major)
                return h, c

            h0 = jnp.zeros((batch, H), jnp.float32)
            c0 = jnp.zeros((batch, H), jnp.float32)
            h_top, _ = lax.fori_loop(0, t_eff, step, (h0, c0), unroll=unroll)

        # hiddens[0][-1] of the PackedSequence == top-layer h at t = t_eff-1, batch row b_star.
        h_last = h_top[b_star:b_star + 1, :]                  # (1, H), static slice
        logits = (jnp.dot(h_last, w_lin_ref[...], preferred_element_type=jnp.float32)
                  + b_lin_ref[...])                           # (1, Vpad)
        out_ref[...] = jax.nn.sigmoid(logits)

    return kernel


def encoder_rnn_forward(features, lengths, params):
    lengths = [int(x) for x in lengths]
    assert all(lengths[i] >= lengths[i + 1] for i in range(len(lengths) - 1)), \
        "pack_padded_sequence (enforce_sorted=True) requires lengths sorted descending"
    t_eff = lengths[0]                                        # packed sequence length
    b_star = sum(1 for l in lengths if l == t_eff) - 1        # batch index of last packed element

    batch, seq, feat_dim = features.shape
    assert t_eff <= seq
    hidden = params["w_hh"][0].shape[0]
    vocab = params["w_lin"].shape[1]
    num_layers = len(params["w_ih"])
    H = hidden

    # Time-major, length-trimmed, single cast, 2-D feature slab -> one big matmul operand.
    feat2d = jnp.transpose(features[:, :t_eff, :], (1, 0, 2)).reshape(t_eff * batch, feat_dim)
    feat2d = feat2d.astype(jnp.float32)

    def permute_gates(w):                                     # [i, f, g, o] -> [i, f, o, g]
        return jnp.concatenate([w[:, :2 * H], w[:, 3 * H:], w[:, 2 * H:3 * H]], axis=-1)

    # Lane-pad the classifier so the single output store is unmasked (last dim multiple of 128).
    vpad = _round_up(vocab, 128)
    w_lin = jnp.zeros((hidden, vpad), jnp.float32).at[:, :vocab].set(params["w_lin"])
    b_lin = jnp.zeros((1, vpad), jnp.float32).at[:, :vocab].set(params["b_lin"])

    args = [feat2d]
    for l in range(num_layers):
        args += [permute_gates(params["w_ih"][l]),
                 permute_gates(params["w_hh"][l]),
                 permute_gates(params["b"][l])]
    args += [w_lin, b_lin]

    t_hbuf = t_eff if num_layers > 1 else 1
    unroll = t_eff <= 32                                       # small fixed trip count -> unroll

    kernel = make_encoder_kernel(num_layers, t_eff, batch, hidden, b_star, unroll)
    out = pl.pallas_call(
        kernel,
        out_shape=jax.ShapeDtypeStruct((1, vpad), jnp.float32),
        in_specs=[pl.BlockSpec(memory_space=pltpu.MemorySpace.VMEM)] * len(args),
        out_specs=pl.BlockSpec(memory_space=pltpu.MemorySpace.VMEM),
        scratch_shapes=[pltpu.VMEM((t_eff, batch, 4 * hidden), jnp.float32),   # precomputed gates
                        pltpu.VMEM((t_hbuf, batch, hidden), jnp.float32)],     # layer outputs
    )(*args)
    return out[0, :vocab]                                      # (vocab,), matches PyTorch 1-D output


def init_params(key, feature_size, hidden_size, vocab_size, num_layers):
    """Deterministic synthetic parameters, PyTorch-style U(-1/sqrt(H), 1/sqrt(H)) init.

    Gate order here is PyTorch's [i, f, g, o]; the wrapper permutes to [i, f, o, g] for the
    kernel's lane-contiguous activation slabs.
    """
    stdv = 1.0 / math.sqrt(hidden_size)
    keys = jax.random.split(key, 4 * num_layers + 2)
    k = 0
    w_ih, w_hh, b = [], [], []
    for l in range(num_layers):
        in_dim = feature_size if l == 0 else hidden_size
        W_ih = jax.random.uniform(keys[k], (4 * hidden_size, in_dim), minval=-stdv, maxval=stdv); k += 1
        W_hh = jax.random.uniform(keys[k], (4 * hidden_size, hidden_size), minval=-stdv, maxval=stdv); k += 1
        b_ih = jax.random.uniform(keys[k], (4 * hidden_size,), minval=-stdv, maxval=stdv); k += 1
        b_hh = jax.random.uniform(keys[k], (4 * hidden_size,), minval=-stdv, maxval=stdv); k += 1
        w_ih.append(jnp.asarray(W_ih.T, jnp.float32))
        w_hh.append(jnp.asarray(W_hh.T, jnp.float32))
        b.append(jnp.asarray((b_ih + b_hh)[None, :], jnp.float32))
    W_lin = jax.random.uniform(keys[k], (vocab_size, hidden_size), minval=-stdv, maxval=stdv); k += 1
    b_lin = jax.random.uniform(keys[k], (vocab_size,), minval=-stdv, maxval=stdv)
    return {"w_ih": w_ih, "w_hh": w_hh, "b": b,
            "w_lin": jnp.asarray(W_lin.T, jnp.float32),
            "b_lin": jnp.asarray(b_lin[None, :], jnp.float32)}


def reference_forward(features, lengths, params):
    """Pure-JAX reference with PyTorch gate order [i, f, g, o] (numerical sanity check)."""
    lengths = [int(x) for x in lengths]
    t_eff = lengths[0]
    b_star = sum(1 for l in lengths if l == t_eff) - 1
    H = params["w_hh"][0].shape[0]
    B = features.shape[0]
    layer_in = features[:, :t_eff, :].astype(jnp.float32)
    for l in range(len(params["w_ih"])):
        h = jnp.zeros((B, H), jnp.float32)
        c = jnp.zeros((B, H), jnp.float32)
        outs = []
        for t in range(t_eff):
            g = layer_in[:, t, :] @ params["w_ih"][l] + h @ params["w_hh"][l] + params["b"][l]
            i_g = jax.nn.sigmoid(g[:, :H]); f_g = jax.nn.sigmoid(g[:, H:2 * H])
            g_g = jnp.tanh(g[:, 2 * H:3 * H]); o_g = jax.nn.sigmoid(g[:, 3 * H:])
            c = f_g * c + i_g * g_g
            h = o_g * jnp.tanh(c)
            outs.append(h)
        layer_in = jnp.stack(outs, axis=1)
    h_last = layer_in[b_star, -1, :]
    return jax.nn.sigmoid(h_last @ params["w_lin"] + params["b_lin"][0])


if __name__ == "__main__":
    feature_size, hidden_size, vocab_size, num_layers = 16, 32, 10, 2
    batch, seq = 2, 8
    lengths = [8, 5]                                          # sorted descending, as pack_padded requires

    key = jax.random.PRNGKey(0)
    k_feat, k_param = jax.random.split(key)
    features = jax.random.normal(k_feat, (batch, seq, feature_size), jnp.float32)
    params = init_params(k_param, feature_size, hidden_size, vocab_size, num_layers)

    out = encoder_rnn_forward(features, lengths, params)
    jax.block_until_ready(out)

    ref = reference_forward(features, lengths, params)
    assert out.shape == (vocab_size,)
    np.testing.assert_allclose(np.asarray(out), np.asarray(ref), rtol=1e-5, atol=1e-5)
    print("KERNEL_OK")
</pallas_src>

<mosaic_0001>
module attributes {stable_mosaic.version = 11 : i64} {
  func.func @kernel(%arg0: memref<16x16xf32, #tpu.memory_space<vmem>>, %arg1: memref<16x128xf32, #tpu.memory_space<vmem>>, %arg2: memref<32x128xf32, #tpu.memory_space<vmem>>, %arg3: memref<1x128xf32, #tpu.memory_space<vmem>>, %arg4: memref<32x128xf32, #tpu.memory_space<vmem>>, %arg5: memref<32x128xf32, #tpu.memory_space<vmem>>, %arg6: memref<1x128xf32, #tpu.memory_space<vmem>>, %arg7: memref<32x128xf32, #tpu.memory_space<vmem>>, %arg8: memref<1x128xf32, #tpu.memory_space<vmem>>, %arg9: memref<1x128xf32, #tpu.memory_space<vmem>>, %arg10: memref<8x2x128xf32, #tpu.memory_space<vmem>>, %arg11: memref<8x2x32xf32, #tpu.memory_space<vmem>>) attributes {dimension_semantics = [], scalar_prefetch = 0 : i64, scratch_operands = 2 : i64, tpu.core_type = #tpu.core_type<tc>} {
    %c0 = arith.constant 0 : index
    %c0_0 = arith.constant 0 : index
    %0 = vector.load %arg1[%c0, %c0_0] : memref<16x128xf32, #tpu.memory_space<vmem>>, vector<16x128xf32>
    %c0_1 = arith.constant 0 : index
    %c0_2 = arith.constant 0 : index
    %1 = vector.load %arg2[%c0_1, %c0_2] : memref<32x128xf32, #tpu.memory_space<vmem>>, vector<32x128xf32>
    %c0_3 = arith.constant 0 : index
    %c0_4 = arith.constant 0 : index
    %2 = vector.load %arg3[%c0_3, %c0_4] : memref<1x128xf32, #tpu.memory_space<vmem>>, vector<1x128xf32>
    %c0_5 = arith.constant 0 : index
    %c0_6 = arith.constant 0 : index
    %3 = vector.load %arg0[%c0_5, %c0_6] : memref<16x16xf32, #tpu.memory_space<vmem>>, vector<16x16xf32>
    %cst = arith.constant dense<0.000000e+00> : vector<16x128xf32>
    %4 = tpu.matmul %3, %0, %cst {dimension_numbers = #tpu.dot_dimension_numbers<[1], [0], [0], [1], [0, 0, 1, 1], [], []>} : vector<16x16xf32>, vector<16x128xf32>, vector<16x128xf32> -> vector<16x128xf32>
    %5 = vector.broadcast %2 : vector<1x128xf32> to vector<16x128xf32>
    %6 = arith.addf %4, %5 : vector<16x128xf32>
    %7 = vector.shape_cast %6 : vector<16x128xf32> to vector<8x2x128xf32>
    %c0_7 = arith.constant 0 : index
    %c0_8 = arith.constant 0 : index
    %c0_9 = arith.constant 0 : index
    %8 = vector.load %arg10[%c0_7, %c0_8, %c0_9] : memref<8x2x128xf32, #tpu.memory_space<vmem>>, vector<8x2x128xf32>
    tpu.vector_store %arg10[%c0_7, %c0_8, %c0_9], %7 {strides = array<i32>} : memref<8x2x128xf32, #tpu.memory_space<vmem>>, vector<8x2x128xf32>,
    %cst_10 = arith.constant 0.000000e+00 : f32
    %9 = vector.broadcast %cst_10 : f32 to vector<2x32xf32>
    %cst_11 = arith.constant 0.000000e+00 : f32
    %10 = vector.broadcast %cst_11 : f32 to vector<2x32xf32>
    %c0_i32 = arith.constant 0 : i32
    %11 = arith.index_cast %c0_i32 : i32 to index
    %c0_12 = arith.constant 0 : index
    %c0_13 = arith.constant 0 : index
    %12 = vector.load %arg10[%11, %c0_12, %c0_13] : memref<8x2x128xf32, #tpu.memory_space<vmem>>, vector<1x2x128xf32>
    %13 = vector.shape_cast %12 : vector<1x2x128xf32> to vector<2x128xf32>
    %cst_14 = arith.constant dense<0.000000e+00> : vector<2x128xf32>
    %14 = tpu.matmul %9, %1, %cst_14 {dimension_numbers = #tpu.dot_dimension_numbers<[1], [0], [0], [1], [0, 0, 1, 1], [], []>} : vector<2x32xf32>, vector<32x128xf32>, vector<2x128xf32> -> vector<2x128xf32>
    %15 = arith.addf %13, %14 : vector<2x128xf32>
    %16 = vector.extract_strided_slice %15 {offsets = [0, 0], sizes = [2, 96], strides = [1, 1]} : vector<2x128xf32> to vector<2x96xf32>
    %17 = arith.negf %16 : vector<2x96xf32>
    %18 = math.exp %17 : vector<2x96xf32>
    %cst_15 = arith.constant 1.000000e+00 : f32
    %19 = vector.broadcast %cst_15 : f32 to vector<2x96xf32>
    %20 = arith.addf %19, %18 : vector<2x96xf32>
    %21 = arith.divf %19, %20 : vector<2x96xf32>
    %22 = vector.extract_strided_slice %21 {offsets = [0, 0], sizes = [2, 32], strides = [1, 1]} : vector<2x96xf32> to vector<2x32xf32>
    %23 = vector.extract_strided_slice %21 {offsets = [0, 32], sizes = [2, 32], strides = [1, 1]} : vector<2x96xf32> to vector<2x32xf32>
    %24 = vector.extract_strided_slice %21 {offsets = [0, 64], sizes = [2, 32], strides = [1, 1]} : vector<2x96xf32> to vector<2x32xf32>
    %25 = vector.extract_strided_slice %15 {offsets = [0, 96], sizes = [2, 32], strides = [1, 1]} : vector<2x128xf32> to vector<2x32xf32>
    %26 = math.tanh %25 : vector<2x32xf32>
    %27 = arith.mulf %23, %10 : vector<2x32xf32>
    %28 = arith.mulf %22, %26 : vector<2x32xf32>
    %29 = arith.addf %27, %28 : vector<2x32xf32>
    %30 = math.tanh %29 : vector<2x32xf32>
    %31 = arith.mulf %24, %30 : vector<2x32xf32>
    %32 = arith.index_cast %c0_i32 : i32 to index
    %c0_16 = arith.constant 0 : index
    %c0_17 = arith.constant 0 : index
    %33 = vector.load %arg11[%32, %c0_16, %c0_17] : memref<8x2x32xf32, #tpu.memory_space<vmem>>, vector<1x2x32xf32>
    %34 = vector.shape_cast %33 : vector<1x2x32xf32> to vector<2x32xf32>
    %35 = vector.shape_cast %31 : vector<2x32xf32> to vector<1x2x32xf32>
    tpu.vector_store %arg11[%32, %c0_16, %c0_17], %35 {strides = array<i32>} : memref<8x2x32xf32, #tpu.memory_space<vmem>>, vector<1x2x32xf32>,
    %c1_i32 = arith.constant 1 : i32
    %36 = arith.index_cast %c1_i32 : i32 to index
    %c0_18 = arith.constant 0 : index
    %c0_19 = arith.constant 0 : index
    %37 = vector.load %arg10[%36, %c0_18, %c0_19] : memref<8x2x128xf32, #tpu.memory_space<vmem>>, vector<1x2x128xf32>
    %38 = vector.shape_cast %37 : vector<1x2x128xf32> to vector<2x128xf32>
    %cst_20 = arith.constant dense<0.000000e+00> : vector<2x128xf32>
    %39 = tpu.matmul %31, %1, %cst_20 {dimension_numbers = #tpu.dot_dimension_numbers<[1], [0], [0], [1], [0, 0, 1, 1], [], []>} : vector<2x32xf32>, vector<32x128xf32>, vector<2x128xf32> -> vector<2x128xf32>
    %40 = arith.addf %38, %39 : vector<2x128xf32>
    %41 = vector.extract_strided_slice %40 {offsets = [0, 0], sizes = [2, 96], strides = [1, 1]} : vector<2x128xf32> to vector<2x96xf32>
    %42 = arith.negf %41 : vector<2x96xf32>
    %43 = math.exp %42 : vector<2x96xf32>
    %cst_21 = arith.constant 1.000000e+00 : f32
    %44 = vector.broadcast %cst_21 : f32 to vector<2x96xf32>
    %45 = arith.addf %44, %43 : vector<2x96xf32>
    %46 = arith.divf %44, %45 : vector<2x96xf32>
    %47 = vector.extract_strided_slice %46 {offsets = [0, 0], sizes = [2, 32], strides = [1, 1]} : vector<2x96xf32> to vector<2x32xf32>
    %48 = vector.extract_strided_slice %46 {offsets = [0, 32], sizes = [2, 32], strides = [1, 1]} : vector<2x96xf32> to vector<2x32xf32>
    %49 = vector.extract_strided_slice %46 {offsets = [0, 64], sizes = [2, 32], strides = [1, 1]} : vector<2x96xf32> to vector<2x32xf32>
    %50 = vector.extract_strided_slice %40 {offsets = [0, 96], sizes = [2, 32], strides = [1, 1]} : vector<2x128xf32> to vector<2x32xf32>
    %51 = math.tanh %50 : vector<2x32xf32>
    %52 = arith.mulf %48, %29 : vector<2x32xf32>
    %53 = arith.mulf %47, %51 : vector<2x32xf32>
    %54 = arith.addf %52, %53 : vector<2x32xf32>
    %55 = math.tanh %54 : vector<2x32xf32>
    %56 = arith.mulf %49, %55 : vector<2x32xf32>
    %57 = arith.index_cast %c1_i32 : i32 to index
    %c0_22 = arith.constant 0 : index
    %c0_23 = arith.constant 0 : index
    %58 = vector.load %arg11[%57, %c0_22, %c0_23] : memref<8x2x32xf32, #tpu.memory_space<vmem>>, vector<1x2x32xf32>
    %59 = vector.shape_cast %58 : vector<1x2x32xf32> to vector<2x32xf32>
    %60 = vector.shape_cast %56 : vector<2x32xf32> to vector<1x2x32xf32>
    tpu.vector_store %arg11[%57, %c0_22, %c0_23], %60 {strides = array<i32>} : memref<8x2x32xf32, #tpu.memory_space<vmem>>, vector<1x2x32xf32>,
    %c2_i32 = arith.constant 2 : i32
    %61 = arith.index_cast %c2_i32 : i32 to index
    %c0_24 = arith.constant 0 : index
    %c0_25 = arith.constant 0 : index
    %62 = vector.load %arg10[%61, %c0_24, %c0_25] : memref<8x2x128xf32, #tpu.memory_space<vmem>>, vector<1x2x128xf32>
    %63 = vector.shape_cast %62 : vector<1x2x128xf32> to vector<2x128xf32>
    %cst_26 = arith.constant dense<0.000000e+00> : vector<2x128xf32>
    %64 = tpu.matmul %56, %1, %cst_26 {dimension_numbers = #tpu.dot_dimension_numbers<[1], [0], [0], [1], [0, 0, 1, 1], [], []>} : vector<2x32xf32>, vector<32x128xf32>, vector<2x128xf32> -> vector<2x128xf32>
    %65 = arith.addf %63, %64 : vector<2x128xf32>
    %66 = vector.extract_strided_slice %65 {offsets = [0, 0], sizes = [2, 96], strides = [1, 1]} : vector<2x128xf32> to vector<2x96xf32>
    %67 = arith.negf %66 : vector<2x96xf32>
    %68 = math.exp %67 : vector<2x96xf32>
    %cst_27 = arith.constant 1.000000e+00 : f32
    %69 = vector.broadcast %cst_27 : f32 to vector<2x96xf32>
    %70 = arith.addf %69, %68 : vector<2x96xf32>
    %71 = arith.divf %69, %70 : vector<2x96xf32>
    %72 = vector.extract_strided_slice %71 {offsets = [0, 0], sizes = [2, 32], strides = [1, 1]} : vector<2x96xf32> to vector<2x32xf32>
    %73 = vector.extract_strided_slice %71 {offsets = [0, 32], sizes = [2, 32], strides = [1, 1]} : vector<2x96xf32> to vector<2x32xf32>
    %74 = vector.extract_strided_slice %71 {offsets = [0, 64], sizes = [2, 32], strides = [1, 1]} : vector<2x96xf32> to vector<2x32xf32>
    %75 = vector.extract_strided_slice %65 {offsets = [0, 96], sizes = [2, 32], strides = [1, 1]} : vector<2x128xf32> to vector<2x32xf32>
    %76 = math.tanh %75 : vector<2x32xf32>
    %77 = arith.mulf %73, %54 : vector<2x32xf32>
    %78 = arith.mulf %72, %76 : vector<2x32xf32>
    %79 = arith.addf %77, %78 : vector<2x32xf32>
    %80 = math.tanh %79 : vector<2x32xf32>
    %81 = arith.mulf %74, %80 : vector<2x32xf32>
    %82 = arith.index_cast %c2_i32 : i32 to index
    %c0_28 = arith.constant 0 : index
    %c0_29 = arith.constant 0 : index
    %83 = vector.load %arg11[%82, %c0_28, %c0_29] : memref<8x2x32xf32, #tpu.memory_space<vmem>>, vector<1x2x32xf32>
    %84 = vector.shape_cast %83 : vector<1x2x32xf32> to vector<2x32xf32>
    %85 = vector.shape_cast %81 : vector<2x32xf32> to vector<1x2x32xf32>
    tpu.vector_store %arg11[%82, %c0_28, %c0_29], %85 {strides = array<i32>} : memref<8x2x32xf32, #tpu.memory_space<vmem>>, vector<1x2x32xf32>,
    %c3_i32 = arith.constant 3 : i32
    %86 = arith.index_cast %c3_i32 : i32 to index
    %c0_30 = arith.constant 0 : index
    %c0_31 = arith.constant 0 : index
    %87 = vector.load %arg10[%86, %c0_30, %c0_31] : memref<8x2x128xf32, #tpu.memory_space<vmem>>, vector<1x2x128xf32>
    %88 = vector.shape_cast %87 : vector<1x2x128xf32> to vector<2x128xf32>
    %cst_32 = arith.constant dense<0.000000e+00> : vector<2x128xf32>
    %89 = tpu.matmul %81, %1, %cst_32 {dimension_numbers = #tpu.dot_dimension_numbers<[1], [0], [0], [1], [0, 0, 1, 1], [], []>} : vector<2x32xf32>, vector<32x128xf32>, vector<2x128xf32> -> vector<2x128xf32>
    %90 = arith.addf %88, %89 : vector<2x128xf32>
    %91 = vector.extract_strided_slice %90 {offsets = [0, 0], sizes = [2, 96], strides = [1, 1]} : vector<2x128xf32> to vector<2x96xf32>
    %92 = arith.negf %91 : vector<2x96xf32>
    %93 = math.exp %92 : vector<2x96xf32>
    %cst_33 = arith.constant 1.000000e+00 : f32
    %94 = vector.broadcast %cst_33 : f32 to vector<2x96xf32>
    %95 = arith.addf %94, %93 : vector<2x96xf32>
    %96 = arith.divf %94, %95 : vector<2x96xf32>
    %97 = vector.extract_strided_slice %96 {offsets = [0, 0], sizes = [2, 32], strides = [1, 1]} : vector<2x96xf32> to vector<2x32xf32>
    %98 = vector.extract_strided_slice %96 {offsets = [0, 32], sizes = [2, 32], strides = [1, 1]} : vector<2x96xf32> to vector<2x32xf32>
    %99 = vector.extract_strided_slice %96 {offsets = [0, 64], sizes = [2, 32], strides = [1, 1]} : vector<2x96xf32> to vector<2x32xf32>
    %100 = vector.extract_strided_slice %90 {offsets = [0, 96], sizes = [2, 32], strides = [1, 1]} : vector<2x128xf32> to vector<2x32xf32>
    %101 = math.tanh %100 : vector<2x32xf32>
    %102 = arith.mulf %98, %79 : vector<2x32xf32>
    %103 = arith.mulf %97, %101 : vector<2x32xf32>
    %104 = arith.addf %102, %103 : vector<2x32xf32>
    %105 = math.tanh %104 : vector<2x32xf32>
    %106 = arith.mulf %99, %105 : vector<2x32xf32>
    %107 = arith.index_cast %c3_i32 : i32 to index
    %c0_34 = arith.constant 0 : index
    %c0_35 = arith.constant 0 : index
    %108 = vector.load %arg11[%107, %c0_34, %c0_35] : memref<8x2x32xf32, #tpu.memory_space<vmem>>, vector<1x2x32xf32>
    %109 = vector.shape_cast %108 : vector<1x2x32xf32> to vector<2x32xf32>
    %110 = vector.shape_cast %106 : vector<2x32xf32> to vector<1x2x32xf32>
    tpu.vector_store %arg11[%107, %c0_34, %c0_35], %110 {strides = array<i32>} : memref<8x2x32xf32, #tpu.memory_space<vmem>>, vector<1x2x32xf32>,
    %c4_i32 = arith.constant 4 : i32
    %111 = arith.index_cast %c4_i32 : i32 to index
    %c0_36 = arith.constant 0 : index
    %c0_37 = arith.constant 0 : index
    %112 = vector.load %arg10[%111, %c0_36, %c0_37] : memref<8x2x128xf32, #tpu.memory_space<vmem>>, vector<1x2x128xf32>
    %113 = vector.shape_cast %112 : vector<1x2x128xf32> to vector<2x128xf32>
    %cst_38 = arith.constant dense<0.000000e+00> : vector<2x128xf32>
    %114 = tpu.matmul %106, %1, %cst_38 {dimension_numbers = #tpu.dot_dimension_numbers<[1], [0], [0], [1], [0, 0, 1, 1], [], []>} : vector<2x32xf32>, vector<32x128xf32>, vector<2x128xf32> -> vector<2x128xf32>
    %115 = arith.addf %113, %114 : vector<2x128xf32>
    %116 = vector.extract_strided_slice %115 {offsets = [0, 0], sizes = [2, 96], strides = [1, 1]} : vector<2x128xf32> to vector<2x96xf32>
    %117 = arith.negf %116 : vector<2x96xf32>
    %118 = math.exp %117 : vector<2x96xf32>
    %cst_39 = arith.constant 1.000000e+00 : f32
    %119 = vector.broadcast %cst_39 : f32 to vector<2x96xf32>
    %120 = arith.addf %119, %118 : vector<2x96xf32>
    %121 = arith.divf %119, %120 : vector<2x96xf32>
    %122 = vector.extract_strided_slice %121 {offsets = [0, 0], sizes = [2, 32], strides = [1, 1]} : vector<2x96xf32> to vector<2x32xf32>
    %123 = vector.extract_strided_slice %121 {offsets = [0, 32], sizes = [2, 32], strides = [1, 1]} : vector<2x96xf32> to vector<2x32xf32>
    %124 = vector.extract_strided_slice %121 {offsets = [0, 64], sizes = [2, 32], strides = [1, 1]} : vector<2x96xf32> to vector<2x32xf32>
    %125 = vector.extract_strided_slice %115 {offsets = [0, 96], sizes = [2, 32], strides = [1, 1]} : vector<2x128xf32> to vector<2x32xf32>
    %126 = math.tanh %125 : vector<2x32xf32>
    %127 = arith.mulf %123, %104 : vector<2x32xf32>
    %128 = arith.mulf %122, %126 : vector<2x32xf32>
    %129 = arith.addf %127, %128 : vector<2x32xf32>
    %130 = math.tanh %129 : vector<2x32xf32>
    %131 = arith.mulf %124, %130 : vector<2x32xf32>
    %132 = arith.index_cast %c4_i32 : i32 to index
    %c0_40 = arith.constant 0 : index
    %c0_41 = arith.constant 0 : index
    %133 = vector.load %arg11[%132, %c0_40, %c0_41] : memref<8x2x32xf32, #tpu.memory_space<vmem>>, vector<1x2x32xf32>
    %134 = vector.shape_cast %133 : vector<1x2x32xf32> to vector<2x32xf32>
    %135 = vector.shape_cast %131 : vector<2x32xf32> to vector<1x2x32xf32>
    tpu.vector_store %arg11[%132, %c0_40, %c0_41], %135 {strides = array<i32>} : memref<8x2x32xf32, #tpu.memory_space<vmem>>, vector<1x2x32xf32>,
    %c5_i32 = arith.constant 5 : i32
    %136 = arith.index_cast %c5_i32 : i32 to index
    %c0_42 = arith.constant 0 : index
    %c0_43 = arith.constant 0 : index
    %137 = vector.load %arg10[%136, %c0_42, %c0_43] : memref<8x2x128xf32, #tpu.memory_space<vmem>>, vector<1x2x128xf32>
    %138 = vector.shape_cast %137 : vector<1x2x128xf32> to vector<2x128xf32>
    %cst_44 = arith.constant dense<0.000000e+00> : vector<2x128xf32>
    %139 = tpu.matmul %131, %1, %cst_44 {dimension_numbers = #tpu.dot_dimension_numbers<[1], [0], [0], [1], [0, 0, 1, 1], [], []>} : vector<2x32xf32>, vector<32x128xf32>, vector<2x128xf32> -> vector<2x128xf32>
    %140 = arith.addf %138, %139 : vector<2x128xf32>
    %141 = vector.extract_strided_slice %140 {offsets = [0, 0], sizes = [2, 96], strides = [1, 1]} : vector<2x128xf32> to vector<2x96xf32>
    %142 = arith.negf %141 : vector<2x96xf32>
    %143 = math.exp %142 : vector<2x96xf32>
    %cst_45 = arith.constant 1.000000e+00 : f32
    %144 = vector.broadcast %cst_45 : f32 to vector<2x96xf32>
    %145 = arith.addf %144, %143 : vector<2x96xf32>
    %146 = arith.divf %144, %145 : vector<2x96xf32>
    %147 = vector.extract_strided_slice %146 {offsets = [0, 0], sizes = [2, 32], strides = [1, 1]} : vector<2x96xf32> to vector<2x32xf32>
    %148 = vector.extract_strided_slice %146 {offsets = [0, 32], sizes = [2, 32], strides = [1, 1]} : vector<2x96xf32> to vector<2x32xf32>
    %149 = vector.extract_strided_slice %146 {offsets = [0, 64], sizes = [2, 32], strides = [1, 1]} : vector<2x96xf32> to vector<2x32xf32>
    %150 = vector.extract_strided_slice %140 {offsets = [0, 96], sizes = [2, 32], strides = [1, 1]} : vector<2x128xf32> to vector<2x32xf32>
    %151 = math.tanh %150 : vector<2x32xf32>
    %152 = arith.mulf %148, %129 : vector<2x32xf32>
    %153 = arith.mulf %147, %151 : vector<2x32xf32>
    %154 = arith.addf %152, %153 : vector<2x32xf32>
    %155 = math.tanh %154 : vector<2x32xf32>
    %156 = arith.mulf %149, %155 : vector<2x32xf32>
    %157 = arith.index_cast %c5_i32 : i32 to index
    %c0_46 = arith.constant 0 : index
    %c0_47 = arith.constant 0 : index
    %158 = vector.load %arg11[%157, %c0_46, %c0_47] : memref<8x2x32xf32, #tpu.memory_space<vmem>>, vector<1x2x32xf32>
    %159 = vector.shape_cast %158 : vector<1x2x32xf32> to vector<2x32xf32>
    %160 = vector.shape_cast %156 : vector<2x32xf32> to vector<1x2x32xf32>
    tpu.vector_store %arg11[%157, %c0_46, %c0_47], %160 {strides = array<i32>} : memref<8x2x32xf32, #tpu.memory_space<vmem>>, vector<1x2x32xf32>,
    %c6_i32 = arith.constant 6 : i32
    %161 = arith.index_cast %c6_i32 : i32 to index
    %c0_48 = arith.constant 0 : index
    %c0_49 = arith.constant 0 : index
    %162 = vector.load %arg10[%161, %c0_48, %c0_49] : memref<8x2x128xf32, #tpu.memory_space<vmem>>, vector<1x2x128xf32>
    %163 = vector.shape_cast %162 : vector<1x2x128xf32> to vector<2x128xf32>
    %cst_50 = arith.constant dense<0.000000e+00> : vector<2x128xf32>
    %164 = tpu.matmul %156, %1, %cst_50 {dimension_numbers = #tpu.dot_dimension_numbers<[1], [0], [0], [1], [0, 0, 1, 1], [], []>} : vector<2x32xf32>, vector<32x128xf32>, vector<2x128xf32> -> vector<2x128xf32>
    %165 = arith.addf %163, %164 : vector<2x128xf32>
    %166 = vector.extract_strided_slice %165 {offsets = [0, 0], sizes = [2, 96], strides = [1, 1]} : vector<2x128xf32> to vector<2x96xf32>
    %167 = arith.negf %166 : vector<2x96xf32>
    %168 = math.exp %167 : vector<2x96xf32>
    %cst_51 = arith.constant 1.000000e+00 : f32
    %169 = vector.broadcast %cst_51 : f32 to vector<2x96xf32>
    %170 = arith.addf %169, %168 : vector<2x96xf32>
    %171 = arith.divf %169, %170 : vector<2x96xf32>
    %172 = vector.extract_strided_slice %171 {offsets = [0, 0], sizes = [2, 32], strides = [1, 1]} : vector<2x96xf32> to vector<2x32xf32>
    %173 = vector.extract_strided_slice %171 {offsets = [0, 32], sizes = [2, 32], strides = [1, 1]} : vector<2x96xf32> to vector<2x32xf32>
    %174 = vector.extract_strided_slice %171 {offsets = [0, 64], sizes = [2, 32], strides = [1, 1]} : vector<2x96xf32> to vector<2x32xf32>
    %175 = vector.extract_strided_slice %165 {offsets = [0, 96], sizes = [2, 32], strides = [1, 1]} : vector<2x128xf32> to vector<2x32xf32>
    %176 = math.tanh %175 : vector<2x32xf32>
    %177 = arith.mulf %173, %154 : vector<2x32xf32>
    %178 = arith.mulf %172, %176 : vector<2x32xf32>
    %179 = arith.addf %177, %178 : vector<2x32xf32>
    %180 = math.tanh %179 : vector<2x32xf32>
    %181 = arith.mulf %174, %180 : vector<2x32xf32>
    %182 = arith.index_cast %c6_i32 : i32 to index
    %c0_52 = arith.constant 0 : index
    %c0_53 = arith.constant 0 : index
    %183 = vector.load %arg11[%182, %c0_52, %c0_53] : memref<8x2x32xf32, #tpu.memory_space<vmem>>, vector<1x2x32xf32>
    %184 = vector.shape_cast %183 : vector<1x2x32xf32> to vector<2x32xf32>
    %185 = vector.shape_cast %181 : vector<2x32xf32> to vector<1x2x32xf32>
    tpu.vector_store %arg11[%182, %c0_52, %c0_53], %185 {strides = array<i32>} : memref<8x2x32xf32, #tpu.memory_space<vmem>>, vector<1x2x32xf32>,
    %c7_i32 = arith.constant 7 : i32
    %186 = arith.index_cast %c7_i32 : i32 to index
    %c0_54 = arith.constant 0 : index
    %c0_55 = arith.constant 0 : index
    %187 = vector.load %arg10[%186, %c0_54, %c0_55] : memref<8x2x128xf32, #tpu.memory_space<vmem>>, vector<1x2x128xf32>
    %188 = vector.shape_cast %187 : vector<1x2x128xf32> to vector<2x128xf32>
    %cst_56 = arith.constant dense<0.000000e+00> : vector<2x128xf32>
    %189 = tpu.matmul %181, %1, %cst_56 {dimension_numbers = #tpu.dot_dimension_numbers<[1], [0], [0], [1], [0, 0, 1, 1], [], []>} : vector<2x32xf32>, vector<32x128xf32>, vector<2x128xf32> -> vector<2x128xf32>
    %190 = arith.addf %188, %189 : vector<2x128xf32>
    %191 = vector.extract_strided_slice %190 {offsets = [0, 0], sizes = [2, 96], strides = [1, 1]} : vector<2x128xf32> to vector<2x96xf32>
    %192 = arith.negf %191 : vector<2x96xf32>
    %193 = math.exp %192 : vector<2x96xf32>
    %cst_57 = arith.constant 1.000000e+00 : f32
    %194 = vector.broadcast %cst_57 : f32 to vector<2x96xf32>
    %195 = arith.addf %194, %193 : vector<2x96xf32>
    %196 = arith.divf %194, %195 : vector<2x96xf32>
    %197 = vector.extract_strided_slice %196 {offsets = [0, 0], sizes = [2, 32], strides = [1, 1]} : vector<2x96xf32> to vector<2x32xf32>
    %198 = vector.extract_strided_slice %196 {offsets = [0, 32], sizes = [2, 32], strides = [1, 1]} : vector<2x96xf32> to vector<2x32xf32>
    %199 = vector.extract_strided_slice %196 {offsets = [0, 64], sizes = [2, 32], strides = [1, 1]} : vector<2x96xf32> to vector<2x32xf32>
    %200 = vector.extract_strided_slice %190 {offsets = [0, 96], sizes = [2, 32], strides = [1, 1]} : vector<2x128xf32> to vector<2x32xf32>
    %201 = math.tanh %200 : vector<2x32xf32>
    %202 = arith.mulf %198, %179 : vector<2x32xf32>
    %203 = arith.mulf %197, %201 : vector<2x32xf32>
    %204 = arith.addf %202, %203 : vector<2x32xf32>
    %205 = math.tanh %204 : vector<2x32xf32>
    %206 = arith.mulf %199, %205 : vector<2x32xf32>
    %207 = arith.index_cast %c7_i32 : i32 to index
    %c0_58 = arith.constant 0 : index
    %c0_59 = arith.constant 0 : index
    %208 = vector.load %arg11[%207, %c0_58, %c0_59] : memref<8x2x32xf32, #tpu.memory_space<vmem>>, vector<1x2x32xf32>
    %209 = vector.shape_cast %208 : vector<1x2x32xf32> to vector<2x32xf32>
    %210 = vector.shape_cast %206 : vector<2x32xf32> to vector<1x2x32xf32>
    tpu.vector_store %arg11[%207, %c0_58, %c0_59], %210 {strides = array<i32>} : memref<8x2x32xf32, #tpu.memory_space<vmem>>, vector<1x2x32xf32>,
    %c8_i32 = arith.constant 8 : i32
    %c0_60 = arith.constant 0 : index
    %c0_61 = arith.constant 0 : index
    %211 = vector.load %arg4[%c0_60, %c0_61] : memref<32x128xf32, #tpu.memory_space<vmem>>, vector<32x128xf32>
    %c0_62 = arith.constant 0 : index
    %c0_63 = arith.constant 0 : index
    %212 = vector.load %arg5[%c0_62, %c0_63] : memref<32x128xf32, #tpu.memory_space<vmem>>, vector<32x128xf32>
    %c0_64 = arith.constant 0 : index
    %c0_65 = arith.constant 0 : index
    %213 = vector.load %arg6[%c0_64, %c0_65] : memref<1x128xf32, #tpu.memory_space<vmem>>, vector<1x128xf32>
    %c0_66 = arith.constant 0 : index
    %c0_67 = arith.constant 0 : index
    %c0_68 = arith.constant 0 : index
    %214 = vector.load %arg11[%c0_66, %c0_67, %c0_68] : memref<8x2x32xf32, #tpu.memory_space<vmem>>, vector<8x2x32xf32>
    %215 = vector.shape_cast %214 : vector<8x2x32xf32> to vector<16x32xf32>
    %cst_69 = arith.constant dense<0.000000e+00> : vector<16x128xf32>
    %216 = tpu.matmul %215, %211, %cst_69 {dimension_numbers = #tpu.dot_dimension_numbers<[1], [0], [0], [1], [0, 0, 1, 1], [], []>} : vector<16x32xf32>, vector<32x128xf32>, vector<16x128xf32> -> vector<16x128xf32>
    %217 = vector.broadcast %213 : vector<1x128xf32> to vector<16x128xf32>
    %218 = arith.addf %216, %217 : vector<16x128xf32>
    %219 = vector.shape_cast %218 : vector<16x128xf32> to vector<8x2x128xf32>
    %c0_70 = arith.constant 0 : index
    %c0_71 = arith.constant 0 : index
    %c0_72 = arith.constant 0 : index
    %220 = vector.load %arg10[%c0_70, %c0_71, %c0_72] : memref<8x2x128xf32, #tpu.memory_space<vmem>>, vector<8x2x128xf32>
    tpu.vector_store %arg10[%c0_70, %c0_71, %c0_72], %219 {strides = array<i32>} : memref<8x2x128xf32, #tpu.memory_space<vmem>>, vector<8x2x128xf32>,
    %cst_73 = arith.constant 0.000000e+00 : f32
    %221 = vector.broadcast %cst_73 : f32 to vector<2x32xf32>
    %cst_74 = arith.constant 0.000000e+00 : f32
    %222 = vector.broadcast %cst_74 : f32 to vector<2x32xf32>
    %c0_i32_75 = arith.constant 0 : i32
    %223 = arith.index_cast %c0_i32_75 : i32 to index
    %c0_76 = arith.constant 0 : index
    %c0_77 = arith.constant 0 : index
    %224 = vector.load %arg10[%223, %c0_76, %c0_77] : memref<8x2x128xf32, #tpu.memory_space<vmem>>, vector<1x2x128xf32>
    %225 = vector.shape_cast %224 : vector<1x2x128xf32> to vector<2x128xf32>
    %cst_78 = arith.constant dense<0.000000e+00> : vector<2x128xf32>
    %226 = tpu.matmul %221, %212, %cst_78 {dimension_numbers = #tpu.dot_dimension_numbers<[1], [0], [0], [1], [0, 0, 1, 1], [], []>} : vector<2x32xf32>, vector<32x128xf32>, vector<2x128xf32> -> vector<2x128xf32>
    %227 = arith.addf %225, %226 : vector<2x128xf32>
    %228 = vector.extract_strided_slice %227 {offsets = [0, 0], sizes = [2, 96], strides = [1, 1]} : vector<2x128xf32> to vector<2x96xf32>
    %229 = arith.negf %228 : vector<2x96xf32>
    %230 = math.exp %229 : vector<2x96xf32>
    %cst_79 = arith.constant 1.000000e+00 : f32
    %231 = vector.broadcast %cst_79 : f32 to vector<2x96xf32>
    %232 = arith.addf %231, %230 : vector<2x96xf32>
    %233 = arith.divf %231, %232 : vector<2x96xf32>
    %234 = vector.extract_strided_slice %233 {offsets = [0, 0], sizes = [2, 32], strides = [1, 1]} : vector<2x96xf32> to vector<2x32xf32>
    %235 = vector.extract_strided_slice %233 {offsets = [0, 32], sizes = [2, 32], strides = [1, 1]} : vector<2x96xf32> to vector<2x32xf32>
    %236 = vector.extract_strided_slice %233 {offsets = [0, 64], sizes = [2, 32], strides = [1, 1]} : vector<2x96xf32> to vector<2x32xf32>
    %237 = vector.extract_strided_slice %227 {offsets = [0, 96], sizes = [2, 32], strides = [1, 1]} : vector<2x128xf32> to vector<2x32xf32>
    %238 = math.tanh %237 : vector<2x32xf32>
    %239 = arith.mulf %235, %222 : vector<2x32xf32>
    %240 = arith.mulf %234, %238 : vector<2x32xf32>
    %241 = arith.addf %239, %240 : vector<2x32xf32>
    %242 = math.tanh %241 : vector<2x32xf32>
    %243 = arith.mulf %236, %242 : vector<2x32xf32>
    %c1_i32_80 = arith.constant 1 : i32
    %244 = arith.index_cast %c1_i32_80 : i32 to index
    %c0_81 = arith.constant 0 : index
    %c0_82 = arith.constant 0 : index
    %245 = vector.load %arg10[%244, %c0_81, %c0_82] : memref<8x2x128xf32, #tpu.memory_space<vmem>>, vector<1x2x128xf32>
    %246 = vector.shape_cast %245 : vector<1x2x128xf32> to vector<2x128xf32>
    %cst_83 = arith.constant dense<0.000000e+00> : vector<2x128xf32>
    %247 = tpu.matmul %243, %212, %cst_83 {dimension_numbers = #tpu.dot_dimension_numbers<[1], [0], [0], [1], [0, 0, 1, 1], [], []>} : vector<2x32xf32>, vector<32x128xf32>, vector<2x128xf32> -> vector<2x128xf32>
    %248 = arith.addf %246, %247 : vector<2x128xf32>
    %249 = vector.extract_strided_slice %248 {offsets = [0, 0], sizes = [2, 96], strides = [1, 1]} : vector<2x128xf32> to vector<2x96xf32>
    %250 = arith.negf %249 : vector<2x96xf32>
    %251 = math.exp %250 : vector<2x96xf32>
    %cst_84 = arith.constant 1.000000e+00 : f32
    %252 = vector.broadcast %cst_84 : f32 to vector<2x96xf32>
    %253 = arith.addf %252, %251 : vector<2x96xf32>
    %254 = arith.divf %252, %253 : vector<2x96xf32>
    %255 = vector.extract_strided_slice %254 {offsets = [0, 0], sizes = [2, 32], strides = [1, 1]} : vector<2x96xf32> to vector<2x32xf32>
    %256 = vector.extract_strided_slice %254 {offsets = [0, 32], sizes = [2, 32], strides = [1, 1]} : vector<2x96xf32> to vector<2x32xf32>
    %257 = vector.extract_strided_slice %254 {offsets = [0, 64], sizes = [2, 32], strides = [1, 1]} : vector<2x96xf32> to vector<2x32xf32>
    %258 = vector.extract_strided_slice %248 {offsets = [0, 96], sizes = [2, 32], strides = [1, 1]} : vector<2x128xf32> to vector<2x32xf32>
    %259 = math.tanh %258 : vector<2x32xf32>
    %260 = arith.mulf %256, %241 : vector<2x32xf32>
    %261 = arith.mulf %255, %259 : vector<2x32xf32>
    %262 = arith.addf %260, %261 : vector<2x32xf32>
    %263 = math.tanh %262 : vector<2x32xf32>
    %264 = arith.mulf %257, %263 : vector<2x32xf32>
    %c2_i32_85 = arith.constant 2 : i32
    %265 = arith.index_cast %c2_i32_85 : i32 to index
    %c0_86 = arith.constant 0 : index
    %c0_87 = arith.constant 0 : index
    %266 = vector.load %arg10[%265, %c0_86, %c0_87] : memref<8x2x128xf32, #tpu.memory_space<vmem>>, vector<1x2x128xf32>
    %267 = vector.shape_cast %266 : vector<1x2x128xf32> to vector<2x128xf32>
    %cst_88 = arith.constant dense<0.000000e+00> : vector<2x128xf32>
    %268 = tpu.matmul %264, %212, %cst_88 {dimension_numbers = #tpu.dot_dimension_numbers<[1], [0], [0], [1], [0, 0, 1, 1], [], []>} : vector<2x32xf32>, vector<32x128xf32>, vector<2x128xf32> -> vector<2x128xf32>
    %269 = arith.addf %267, %268 : vector<2x128xf32>
    %270 = vector.extract_strided_slice %269 {offsets = [0, 0], sizes = [2, 96], strides = [1, 1]} : vector<2x128xf32> to vector<2x96xf32>
    %271 = arith.negf %270 : vector<2x96xf32>
    %272 = math.exp %271 : vector<2x96xf32>
    %cst_89 = arith.constant 1.000000e+00 : f32
    %273 = vector.broadcast %cst_89 : f32 to vector<2x96xf32>
    %274 = arith.addf %273, %272 : vector<2x96xf32>
    %275 = arith.divf %273, %274 : vector<2x96xf32>
    %276 = vector.extract_strided_slice %275 {offsets = [0, 0], sizes = [2, 32], strides = [1, 1]} : vector<2x96xf32> to vector<2x32xf32>
    %277 = vector.extract_strided_slice %275 {offsets = [0, 32], sizes = [2, 32], strides = [1, 1]} : vector<2x96xf32> to vector<2x32xf32>
    %278 = vector.extract_strided_slice %275 {offsets = [0, 64], sizes = [2, 32], strides = [1, 1]} : vector<2x96xf32> to vector<2x32xf32>
    %279 = vector.extract_strided_slice %269 {offsets = [0, 96], sizes = [2, 32], strides = [1, 1]} : vector<2x128xf32> to vector<2x32xf32>
    %280 = math.tanh %279 : vector<2x32xf32>
    %281 = arith.mulf %277, %262 : vector<2x32xf32>
    %282 = arith.mulf %276, %280 : vector<2x32xf32>
    %283 = arith.addf %281, %282 : vector<2x32xf32>
    %284 = math.tanh %283 : vector<2x32xf32>
    %285 = arith.mulf %278, %284 : vector<2x32xf32>
    %c3_i32_90 = arith.constant 3 : i32
    %286 = arith.index_cast %c3_i32_90 : i32 to index
    %c0_91 = arith.constant 0 : index
    %c0_92 = arith.constant 0 : index
    %287 = vector.load %arg10[%286, %c0_91, %c0_92] : memref<8x2x128xf32, #tpu.memory_space<vmem>>, vector<1x2x128xf32>
    %288 = vector.shape_cast %287 : vector<1x2x128xf32> to vector<2x128xf32>
    %cst_93 = arith.constant dense<0.000000e+00> : vector<2x128xf32>
    %289 = tpu.matmul %285, %212, %cst_93 {dimension_numbers = #tpu.dot_dimension_numbers<[1], [0], [0], [1], [0, 0, 1, 1], [], []>} : vector<2x32xf32>, vector<32x128xf32>, vector<2x128xf32> -> vector<2x128xf32>
    %290 = arith.addf %288, %289 : vector<2x128xf32>
    %291 = vector.extract_strided_slice %290 {offsets = [0, 0], sizes = [2, 96], strides = [1, 1]} : vector<2x128xf32> to vector<2x96xf32>
    %292 = arith.negf %291 : vector<2x96xf32>
    %293 = math.exp %292 : vector<2x96xf32>
    %cst_94 = arith.constant 1.000000e+00 : f32
    %294 = vector.broadcast %cst_94 : f32 to vector<2x96xf32>
    %295 = arith.addf %294, %293 : vector<2x96xf32>
    %296 = arith.divf %294, %295 : vector<2x96xf32>
    %297 = vector.extract_strided_slice %296 {offsets = [0, 0], sizes = [2, 32], strides = [1, 1]} : vector<2x96xf32> to vector<2x32xf32>
    %298 = vector.extract_strided_slice %296 {offsets = [0, 32], sizes = [2, 32], strides = [1, 1]} : vector<2x96xf32> to vector<2x32xf32>
    %299 = vector.extract_strided_slice %296 {offsets = [0, 64], sizes = [2, 32], strides = [1, 1]} : vector<2x96xf32> to vector<2x32xf32>
    %300 = vector.extract_strided_slice %290 {offsets = [0, 96], sizes = [2, 32], strides = [1, 1]} : vector<2x128xf32> to vector<2x32xf32>
    %301 = math.tanh %300 : vector<2x32xf32>
    %302 = arith.mulf %298, %283 : vector<2x32xf32>
    %303 = arith.mulf %297, %301 : vector<2x32xf32>
    %304 = arith.addf %302, %303 : vector<2x32xf32>
    %305 = math.tanh %304 : vector<2x32xf32>
    %306 = arith.mulf %299, %305 : vector<2x32xf32>
    %c4_i32_95 = arith.constant 4 : i32
    %307 = arith.index_cast %c4_i32_95 : i32 to index
    %c0_96 = arith.constant 0 : index
    %c0_97 = arith.constant 0 : index
    %308 = vector.load %arg10[%307, %c0_96, %c0_97] : memref<8x2x128xf32, #tpu.memory_space<vmem>>, vector<1x2x128xf32>
    %309 = vector.shape_cast %308 : vector<1x2x128xf32> to vector<2x128xf32>
    %cst_98 = arith.constant dense<0.000000e+00> : vector<2x128xf32>
    %310 = tpu.matmul %306, %212, %cst_98 {dimension_numbers = #tpu.dot_dimension_numbers<[1], [0], [0], [1], [0, 0, 1, 1], [], []>} : vector<2x32xf32>, vector<32x128xf32>, vector<2x128xf32> -> vector<2x128xf32>
    %311 = arith.addf %309, %310 : vector<2x128xf32>
    %312 = vector.extract_strided_slice %311 {offsets = [0, 0], sizes = [2, 96], strides = [1, 1]} : vector<2x128xf32> to vector<2x96xf32>
    %313 = arith.negf %312 : vector<2x96xf32>
    %314 = math.exp %313 : vector<2x96xf32>
    %cst_99 = arith.constant 1.000000e+00 : f32
    %315 = vector.broadcast %cst_99 : f32 to vector<2x96xf32>
    %316 = arith.addf %315, %314 : vector<2x96xf32>
    %317 = arith.divf %315, %316 : vector<2x96xf32>
    %318 = vector.extract_strided_slice %317 {offsets = [0, 0], sizes = [2, 32], strides = [1, 1]} : vector<2x96xf32> to vector<2x32xf32>
    %319 = vector.extract_strided_slice %317 {offsets = [0, 32], sizes = [2, 32], strides = [1, 1]} : vector<2x96xf32> to vector<2x32xf32>
    %320 = vector.extract_strided_slice %317 {offsets = [0, 64], sizes = [2, 32], strides = [1, 1]} : vector<2x96xf32> to vector<2x32xf32>
    %321 = vector.extract_strided_slice %311 {offsets = [0, 96], sizes = [2, 32], strides = [1, 1]} : vector<2x128xf32> to vector<2x32xf32>
    %322 = math.tanh %321 : vector<2x32xf32>
    %323 = arith.mulf %319, %304 : vector<2x32xf32>
    %324 = arith.mulf %318, %322 : vector<2x32xf32>
    %325 = arith.addf %323, %324 : vector<2x32xf32>
    %326 = math.tanh %325 : vector<2x32xf32>
    %327 = arith.mulf %320, %326 : vector<2x32xf32>
    %c5_i32_100 = arith.constant 5 : i32
    %328 = arith.index_cast %c5_i32_100 : i32 to index
    %c0_101 = arith.constant 0 : index
    %c0_102 = arith.constant 0 : index
    %329 = vector.load %arg10[%328, %c0_101, %c0_102] : memref<8x2x128xf32, #tpu.memory_space<vmem>>, vector<1x2x128xf32>
    %330 = vector.shape_cast %329 : vector<1x2x128xf32> to vector<2x128xf32>
    %cst_103 = arith.constant dense<0.000000e+00> : vector<2x128xf32>
    %331 = tpu.matmul %327, %212, %cst_103 {dimension_numbers = #tpu.dot_dimension_numbers<[1], [0], [0], [1], [0, 0, 1, 1], [], []>} : vector<2x32xf32>, vector<32x128xf32>, vector<2x128xf32> -> vector<2x128xf32>
    %332 = arith.addf %330, %331 : vector<2x128xf32>
    %333 = vector.extract_strided_slice %332 {offsets = [0, 0], sizes = [2, 96], strides = [1, 1]} : vector<2x128xf32> to vector<2x96xf32>
    %334 = arith.negf %333 : vector<2x96xf32>
    %335 = math.exp %334 : vector<2x96xf32>
    %cst_104 = arith.constant 1.000000e+00 : f32
    %336 = vector.broadcast %cst_104 : f32 to vector<2x96xf32>
    %337 = arith.addf %336, %335 : vector<2x96xf32>
    %338 = arith.divf %336, %337 : vector<2x96xf32>
    %339 = vector.extract_strided_slice %338 {offsets = [0, 0], sizes = [2, 32], strides = [1, 1]} : vector<2x96xf32> to vector<2x32xf32>
    %340 = vector.extract_strided_slice %338 {offsets = [0, 32], sizes = [2, 32], strides = [1, 1]} : vector<2x96xf32> to vector<2x32xf32>
    %341 = vector.extract_strided_slice %338 {offsets = [0, 64], sizes = [2, 32], strides = [1, 1]} : vector<2x96xf32> to vector<2x32xf32>
    %342 = vector.extract_strided_slice %332 {offsets = [0, 96], sizes = [2, 32], strides = [1, 1]} : vector<2x128xf32> to vector<2x32xf32>
    %343 = math.tanh %342 : vector<2x32xf32>
    %344 = arith.mulf %340, %325 : vector<2x32xf32>
    %345 = arith.mulf %339, %343 : vector<2x32xf32>
    %346 = arith.addf %344, %345 : vector<2x32xf32>
    %347 = math.tanh %346 : vector<2x32xf32>
    %348 = arith.mulf %341, %347 : vector<2x32xf32>
    %c6_i32_105 = arith.constant 6 : i32
    %349 = arith.index_cast %c6_i32_105 : i32 to index
    %c0_106 = arith.constant 0 : index
    %c0_107 = arith.constant 0 : index
    %350 = vector.load %arg10[%349, %c0_106, %c0_107] : memref<8x2x128xf32, #tpu.memory_space<vmem>>, vector<1x2x128xf32>
    %351 = vector.shape_cast %350 : vector<1x2x128xf32> to vector<2x128xf32>
    %cst_108 = arith.constant dense<0.000000e+00> : vector<2x128xf32>
    %352 = tpu.matmul %348, %212, %cst_108 {dimension_numbers = #tpu.dot_dimension_numbers<[1], [0], [0], [1], [0, 0, 1, 1], [], []>} : vector<2x32xf32>, vector<32x128xf32>, vector<2x128xf32> -> vector<2x128xf32>
    %353 = arith.addf %351, %352 : vector<2x128xf32>
    %354 = vector.extract_strided_slice %353 {offsets = [0, 0], sizes = [2, 96], strides = [1, 1]} : vector<2x128xf32> to vector<2x96xf32>
    %355 = arith.negf %354 : vector<2x96xf32>
    %356 = math.exp %355 : vector<2x96xf32>
    %cst_109 = arith.constant 1.000000e+00 : f32
    %357 = vector.broadcast %cst_109 : f32 to vector<2x96xf32>
    %358 = arith.addf %357, %356 : vector<2x96xf32>
    %359 = arith.divf %357, %358 : vector<2x96xf32>
    %360 = vector.extract_strided_slice %359 {offsets = [0, 0], sizes = [2, 32], strides = [1, 1]} : vector<2x96xf32> to vector<2x32xf32>
    %361 = vector.extract_strided_slice %359 {offsets = [0, 32], sizes = [2, 32], strides = [1, 1]} : vector<2x96xf32> to vector<2x32xf32>
    %362 = vector.extract_strided_slice %359 {offsets = [0, 64], sizes = [2, 32], strides = [1, 1]} : vector<2x96xf32> to vector<2x32xf32>
    %363 = vector.extract_strided_slice %353 {offsets = [0, 96], sizes = [2, 32], strides = [1, 1]} : vector<2x128xf32> to vector<2x32xf32>
    %364 = math.tanh %363 : vector<2x32xf32>
    %365 = arith.mulf %361, %346 : vector<2x32xf32>
    %366 = arith.mulf %360, %364 : vector<2x32xf32>
    %367 = arith.addf %365, %366 : vector<2x32xf32>
    %368 = math.tanh %367 : vector<2x32xf32>
    %369 = arith.mulf %362, %368 : vector<2x32xf32>
    %c7_i32_110 = arith.constant 7 : i32
    %370 = arith.index_cast %c7_i32_110 : i32 to index
    %c0_111 = arith.constant 0 : index
    %c0_112 = arith.constant 0 : index
    %371 = vector.load %arg10[%370, %c0_111, %c0_112] : memref<8x2x128xf32, #tpu.memory_space<vmem>>, vector<1x2x128xf32>
    %372 = vector.shape_cast %371 : vector<1x2x128xf32> to vector<2x128xf32>
    %cst_113 = arith.constant dense<0.000000e+00> : vector<2x128xf32>
    %373 = tpu.matmul %369, %212, %cst_113 {dimension_numbers = #tpu.dot_dimension_numbers<[1], [0], [0], [1], [0, 0, 1, 1], [], []>} : vector<2x32xf32>, vector<32x128xf32>, vector<2x128xf32> -> vector<2x128xf32>
    %374 = arith.addf %372, %373 : vector<2x128xf32>
    %375 = vector.extract_strided_slice %374 {offsets = [0, 0], sizes = [2, 96], strides = [1, 1]} : vector<2x128xf32> to vector<2x96xf32>
    %376 = arith.negf %375 : vector<2x96xf32>
    %377 = math.exp %376 : vector<2x96xf32>
    %cst_114 = arith.constant 1.000000e+00 : f32
    %378 = vector.broadcast %cst_114 : f32 to vector<2x96xf32>
    %379 = arith.addf %378, %377 : vector<2x96xf32>
    %380 = arith.divf %378, %379 : vector<2x96xf32>
    %381 = vector.extract_strided_slice %380 {offsets = [0, 0], sizes = [2, 32], strides = [1, 1]} : vector<2x96xf32> to vector<2x32xf32>
    %382 = vector.extract_strided_slice %380 {offsets = [0, 32], sizes = [2, 32], strides = [1, 1]} : vector<2x96xf32> to vector<2x32xf32>
    %383 = vector.extract_strided_slice %380 {offsets = [0, 64], sizes = [2, 32], strides = [1, 1]} : vector<2x96xf32> to vector<2x32xf32>
    %384 = vector.extract_strided_slice %374 {offsets = [0, 96], sizes = [2, 32], strides = [1, 1]} : vector<2x128xf32> to vector<2x32xf32>
    %385 = math.tanh %384 : vector<2x32xf32>
    %386 = arith.mulf %382, %367 : vector<2x32xf32>
    %387 = arith.mulf %381, %385 : vector<2x32xf32>
    %388 = arith.addf %386, %387 : vector<2x32xf32>
    %389 = math.tanh %388 : vector<2x32xf32>
    %390 = arith.mulf %383, %389 : vector<2x32xf32>
    %c8_i32_115 = arith.constant 8 : i32
    %391 = vector.extract_strided_slice %390 {offsets = [0, 0], sizes = [1, 32], strides = [1, 1]} : vector<2x32xf32> to vector<1x32xf32>
    %c0_116 = arith.constant 0 : index
    %c0_117 = arith.constant 0 : index
    %392 = vector.load %arg7[%c0_116, %c0_117] : memref<32x128xf32, #tpu.memory_space<vmem>>, vector<32x128xf32>
    %cst_118 = arith.constant dense<0.000000e+00> : vector<1x128xf32>
    %393 = tpu.matmul %391, %392, %cst_118 {dimension_numbers = #tpu.dot_dimension_numbers<[1], [0], [0], [1], [0, 0, 1, 1], [], []>} : vector<1x32xf32>, vector<32x128xf32>, vector<1x128xf32> -> vector<1x128xf32>
    %c0_119 = arith.constant 0 : index
    %c0_120 = arith.constant 0 : index
    %394 = vector.load %arg8[%c0_119, %c0_120] : memref<1x128xf32, #tpu.memory_space<vmem>>, vector<1x128xf32>
    %395 = arith.addf %393, %394 : vector<1x128xf32>
    %396 = arith.negf %395 : vector<1x128xf32>
    %397 = math.exp %396 : vector<1x128xf32>
    %cst_121 = arith.constant 1.000000e+00 : f32
    %398 = vector.broadcast %cst_121 : f32 to vector<1x128xf32>
    %399 = arith.addf %398, %397 : vector<1x128xf32>
    %400 = arith.divf %398, %399 : vector<1x128xf32>
    %c0_122 = arith.constant 0 : index
    %c0_123 = arith.constant 0 : index
    %401 = vector.load %arg9[%c0_122, %c0_123] : memref<1x128xf32, #tpu.memory_space<vmem>>, vector<1x128xf32>
    tpu.vector_store %arg9[%c0_122, %c0_123], %400 {strides = array<i32>} : memref<1x128xf32, #tpu.memory_space<vmem>>, vector<1x128xf32>,
    return
  }
}

</mosaic_0001>

<llo_original>
// kernel: tpu_custom_call.1
$region0: #{tpu_custom_call.1}
  #allocation0 [shape = 'u32[]', space=smem, size = 0x4, offset = 0x4, fixed_abs, tag = 'smem constant byte address 0x4 - core index']
  #allocation1 [shape = 'u32[72,128]{1,0:T(1,128)}', space=vmem, size = 0x9000, scoped, tag = 'internal scratch']
  #allocation2 [shape = 'f32[8,2,128]{2,1,0:T(2,128)}', space=vmem, size = 0x2000, scoped, tag = 'scratch operand']
  #allocation3 [shape = 'f32[8,2,32]{2,1,0:T(2,128)}', space=vmem, size = 0x2000, scoped, tag = 'scratch operand']
  %s0 = inlined_call_operand.hbm [shape: f32[16,16], index: 0, kind: input, shape index: {}]
  %s1 = inlined_call_operand.hbm [shape: f32[16,128], index: 1, kind: input, shape index: {}]
  %s2 = inlined_call_operand.hbm [shape: f32[32,128], index: 2, kind: input, shape index: {}]
  %s3 = inlined_call_operand.vmem [shape: f32[1,128], index: 3, kind: input, shape index: {}]
  %s4 = inlined_call_operand.hbm [shape: f32[32,128], index: 4, kind: input, shape index: {}]
  %s5 = inlined_call_operand.hbm [shape: f32[32,128], index: 5, kind: input, shape index: {}]
  %s6 = inlined_call_operand.vmem [shape: f32[1,128], index: 6, kind: input, shape index: {}]
  %s7 = inlined_call_operand.hbm [shape: f32[32,128], index: 7, kind: input, shape index: {}]
  %s8 = inlined_call_operand.vmem [shape: f32[1,128], index: 8, kind: input, shape index: {}]
  %s9 = inlined_call_operand.hbm [shape: f32[1,128], index: 9, kind: output, shape index: {}]
  %s10 = sld [smem:[#allocation0]]
  $region70: #{tpu_custom_call.1} parent=0
    _
  %s12 = ssub.s32 1, %s10
  %s13 = scalar_select 0, %s12, %s10
  $region1: #{tpu_custom_call.1} parent=0
    #allocation4 [shape = 'u8[8192]{0}', space=vmem, size = 0x2000, scoped, tag = 'input window, operand 0, single buffered']
    #allocation5 [shape = 's32[1]{0}', space=sflag, size = 0x4, scoped, tag = 'scoped memory for tpu_custom_call.1']
    #allocation6 [shape = 's32[1]{0}', space=sflag, size = 0x4, scoped, tag = 'scoped memory for tpu_custom_call.1']
    #allocation7 [shape = 'u8[8192]{0}', space=vmem, size = 0x2000, scoped, tag = 'input window, operand 1, single buffered']
    #allocation8 [shape = 's32[1]{0}', space=sflag, size = 0x4, scoped, tag = 'scoped memory for tpu_custom_call.1']
    #allocation9 [shape = 'u8[16384]{0}', space=vmem, size = 0x4000, scoped, tag = 'input window, operand 2, single buffered']
    #allocation10 [shape = 'u8[16384]{0}', space=vmem, size = 0x4000, scoped, tag = 'input window, operand 4, single buffered']
    #allocation11 [shape = 's32[1]{0}', space=sflag, size = 0x4, scoped, tag = 'scoped memory for tpu_custom_call.1']
    #allocation12 [shape = 'u8[16384]{0}', space=vmem, size = 0x4000, scoped, tag = 'input window, operand 5, single buffered']
    #allocation13 [shape = 'u8[16384]{0}', space=vmem, size = 0x4000, scoped, tag = 'input window, operand 7, single buffered']
    #allocation14 [shape = 's32[1]{0}', space=sflag, size = 0x4, scoped, tag = 'scoped memory for tpu_custom_call.1']
    #allocation15 [shape = 'u8[512]{0}', space=vmem, size = 0x400, scoped, tag = 'output window, operand 0, single buffered']
    %14 = vsyncpa [#allocation5], 0
    %15 = vsyncpa [#allocation8], 0
    %16 = vsyncpa [#allocation11], 0
    %17 = vsyncpa [#allocation14], 0
    %18 = vsyncpa [#allocation6], 0
    // Predicated region
    $region2: #{tpu_custom_call.1} parent=1 // pred_check
      _
    $region3: #{tpu_custom_call.1} parent=1 // pred_check_branch
      %20 = sbr.rel (0) target = $region5
    $region4: #{tpu_custom_call.1} parent=1 // pred_region
      %22 = vsyncadd [#allocation5], 0
      %s23 = sshll.u32 %s0, 4
      %s24 = int_to_ptr.hbm [resolvable:$true] %s23
      %s25 = sshll.u32 [#allocation4], 4
      %s26 = int_to_ptr.vmem [resolvable:$true] %s25
      %31 = dma.hbm_to_vmem [thread:$0]  %s24, 256, %s26, [#allocation5], 128, 128, 8
    $region5: #{tpu_custom_call.1} parent=1 // pred_fallthru
      _
    // Predicated region
    $region6: #{tpu_custom_call.1} parent=1 // pred_check
      _
    $region7: #{tpu_custom_call.1} parent=1 // pred_check_branch
      %33 = sbr.rel (0) target = $region9
    $region8: #{tpu_custom_call.1} parent=1 // pred_region
      %35 = vsyncadd [#allocation8], 0
      %s36 = sshll.u32 %s1, 4
      %s37 = int_to_ptr.hbm [resolvable:$true] %s36
      %s38 = sshll.u32 [#allocation7], 4
      %s39 = int_to_ptr.vmem [resolvable:$true] %s38
      %44 = dma.hbm_to_vmem [thread:$0]  %s37, 256, %s39, [#allocation8], 128, 128, 8
    $region9: #{tpu_custom_call.1} parent=1 // pred_fallthru
      _
    // Predicated region
    $region10: #{tpu_custom_call.1} parent=1 // pred_check
      _
    $region11: #{tpu_custom_call.1} parent=1 // pred_check_branch
      %46 = sbr.rel (0) target = $region13
    $region12: #{tpu_custom_call.1} parent=1 // pred_region
      %48 = vsyncadd [#allocation8], 0
      %s49 = sshll.u32 %s2, 4
      %s50 = int_to_ptr.hbm [resolvable:$true] %s49
      %s51 = sshll.u32 [#allocation9], 4
      %s52 = int_to_ptr.vmem [resolvable:$true] %s51
      %57 = dma.hbm_to_vmem [thread:$0]  %s50, 512, %s52, [#allocation8], 128, 128, 8
    $region13: #{tpu_custom_call.1} parent=1 // pred_fallthru
      _
    // Predicated region
    $region14: #{tpu_custom_call.1} parent=1 // pred_check
      _
    $region15: #{tpu_custom_call.1} parent=1 // pred_check_branch
      %59 = sbr.rel (0) target = $region17
    $region16: #{tpu_custom_call.1} parent=1 // pred_region
      _
    $region17: #{tpu_custom_call.1} parent=1 // pred_fallthru
      _
    // Predicated region
    $region18: #{tpu_custom_call.1} parent=1 // pred_check
      _
    $region19: #{tpu_custom_call.1} parent=1 // pred_check_branch
      %61 = sbr.rel (0) target = $region21
    $region20: #{tpu_custom_call.1} parent=1 // pred_region
      %63 = vsyncadd [#allocation11], 0
      %s64 = sshll.u32 %s4, 4
      %s65 = int_to_ptr.hbm [resolvable:$true] %s64
      %s66 = sshll.u32 [#allocation10], 4
      %s67 = int_to_ptr.vmem [resolvable:$true] %s66
      %72 = dma.hbm_to_vmem [thread:$0]  %s65, 512, %s67, [#allocation11], 128, 128, 8
    $region21: #{tpu_custom_call.1} parent=1 // pred_fallthru
      _
    // Predicated region
    $region22: #{tpu_custom_call.1} parent=1 // pred_check
      _
    $region23: #{tpu_custom_call.1} parent=1 // pred_check_branch
      %74 = sbr.rel (0) target = $region25
    $region24: #{tpu_custom_call.1} parent=1 // pred_region
      %76 = vsyncadd [#allocation11], 0
      %s77 = sshll.u32 %s5, 4
      %s78 = int_to_ptr.hbm [resolvable:$true] %s77
      %s79 = sshll.u32 [#allocation12], 4
      %s80 = int_to_ptr.vmem [resolvable:$true] %s79
      %85 = dma.hbm_to_vmem [thread:$0]  %s78, 512, %s80, [#allocation11], 128, 128, 8
    $region25: #{tpu_custom_call.1} parent=1 // pred_fallthru
      _
    // Predicated region
    $region26: #{tpu_custom_call.1} parent=1 // pred_check
      _
    $region27: #{tpu_custom_call.1} parent=1 // pred_check_branch
      %87 = sbr.rel (0) target = $region29
    $region28: #{tpu_custom_call.1} parent=1 // pred_region
      _
    $region29: #{tpu_custom_call.1} parent=1 // pred_fallthru
      _
    // Predicated region
    $region30: #{tpu_custom_call.1} parent=1 // pred_check
      _
    $region31: #{tpu_custom_call.1} parent=1 // pred_check_branch
      %89 = sbr.rel (0) target = $region33
    $region32: #{tpu_custom_call.1} parent=1 // pred_region
      %91 = vsyncadd [#allocation14], 0
      %s92 = sshll.u32 %s7, 4
      %s93 = int_to_ptr.hbm [resolvable:$true] %s92
      %s94 = sshll.u32 [#allocation13], 4
      %s95 = int_to_ptr.vmem [resolvable:$true] %s94
      %100 = dma.hbm_to_vmem [thread:$0]  %s93, 512, %s95, [#allocation14], 128, 128, 8
    $region33: #{tpu_custom_call.1} parent=1 // pred_fallthru
      _
    // Predicated region
    $region34: #{tpu_custom_call.1} parent=1 // pred_check
      _
    $region35: #{tpu_custom_call.1} parent=1 // pred_check_branch
      %102 = sbr.rel (0) target = $region37
    $region36: #{tpu_custom_call.1} parent=1 // pred_region
      _
    $region37: #{tpu_custom_call.1} parent=1 // pred_fallthru
      _
    // Predicated region
    $region38: #{tpu_custom_call.1} parent=1 // pred_check
      _
    $region39: #{tpu_custom_call.1} parent=1 // pred_check_branch
      %104 = sbr.rel (0) target = $region41
    $region40: #{tpu_custom_call.1} parent=1 // pred_region
      %106 = dma.done [#allocation5], 256
    $region41: #{tpu_custom_call.1} parent=1 // pred_fallthru
      _
    // Predicated region
    $region42: #{tpu_custom_call.1} parent=1 // pred_check
      _
    $region43: #{tpu_custom_call.1} parent=1 // pred_check_branch
      %108 = sbr.rel (0) target = $region45
    $region44: #{tpu_custom_call.1} parent=1 // pred_region
      %110 = dma.done [#allocation8], 256
    $region45: #{tpu_custom_call.1} parent=1 // pred_fallthru
      _
    // Predicated region
    $region46: #{tpu_custom_call.1} parent=1 // pred_check
      _
    $region47: #{tpu_custom_call.1} parent=1 // pred_check_branch
      %112 = sbr.rel (0) target = $region49
    $region48: #{tpu_custom_call.1} parent=1 // pred_region
      %114 = dma.done [#allocation8], 512
    $region49: #{tpu_custom_call.1} parent=1 // pred_fallthru
      _
    // Predicated region
    $region50: #{tpu_custom_call.1} parent=1 // pred_check
      _
    $region51: #{tpu_custom_call.1} parent=1 // pred_check_branch
      %116 = sbr.rel (0) target = $region53
    $region52: #{tpu_custom_call.1} parent=1 // pred_region
      %118 = dma.done [#allocation11], 512
    $region53: #{tpu_custom_call.1} parent=1 // pred_fallthru
      _
    // Predicated region
    $region54: #{tpu_custom_call.1} parent=1 // pred_check
      _
    $region55: #{tpu_custom_call.1} parent=1 // pred_check_branch
      %120 = sbr.rel (0) target = $region57
    $region56: #{tpu_custom_call.1} parent=1 // pred_region
      %122 = dma.done [#allocation11], 512
    $region57: #{tpu_custom_call.1} parent=1 // pred_fallthru
      _
    // Predicated region
    $region58: #{tpu_custom_call.1} parent=1 // pred_check
      _
    $region59: #{tpu_custom_call.1} parent=1 // pred_check_branch
      %124 = sbr.rel (0) target = $region61
    $region60: #{tpu_custom_call.1} parent=1 // pred_region
      %126 = dma.done [#allocation14], 512
    $region61: #{tpu_custom_call.1} parent=1 // pred_fallthru
      _
    %v127 = vld [vmem:[#allocation7] sm:$0xff]
    %v128 = vld [vmem:[#allocation7 + $0x8] sm:$0xff]
    %v129 = vld [vmem:[#allocation9] sm:$0xff]
    %v130 = vld [vmem:[#allocation9 + $0x8] sm:$0xff]
    %v131 = vld [vmem:[#allocation9 + $0x10] sm:$0xff]
    %v132 = vld [vmem:[#allocation9 + $0x18] sm:$0xff]
    %v133 = vld [vmem:[%s3] sm:$0x1]
    %v134 = vld [vmem:[#allocation4] sm:$0xff]
    %v135 = vld [vmem:[#allocation4 + $0x8] sm:$0xff]
    %v137 = vperm.slane %v133, 0
    %vm139 = vcmask 130048
    %v141 = vsel %vm139, %v134, 0
    %v144 = vsel %vm139, %v135, 0
    %146 = vmatpush.msra.mxu0 0.0
    %147 = vmatpush.msra.mxu0 0.0
    %148 = vmatpush.msra.mxu0 0.0
    %149 = vmatpush.msra.mxu0 0.0
    %150 = vmatpush.msra.mxu0 0.0
    %151 = vmatpush.msra.mxu0 0.0
    %152 = vmatpush.msra.mxu0 0.0
    %153 = vmatpush.msra.mxu0 0.0
    %154 = vmatpush.msra.mxu0 0.0
    %155 = vmatpush.msra.mxu0 0.0
    %156 = vmatpush.msra.mxu0 0.0
    %157 = vmatpush.msra.mxu0 0.0
    %158 = vmatpush.msra.mxu0 0.0
    %159 = vmatpush.msra.mxu0 0.0
    %160 = vmatpush.msra.mxu0 %v128
    %161 = vmatpush.msra.mxu0 %v127
    %162 = vmatmul.f32.gmra.mxu0 %v141
    %v163 = vpop.f32.mrf.mxu0
    %v164 = vadd.f32 %v137, %v163
    %165 = vmatmul.f32.gmra.mxu0 %v144
    %v166 = vpop.f32.mrf.mxu0
    %v167 = vadd.f32 %v137, %v166
    %168 = vdwg.mxu0
    %v171 = vrot.slane %v164, 2
    %v172 = vrot.slane %v164, 4
    %v173 = vrot.slane %v164, 6
    %v174 = vrot.slane %v167, 2
    %v175 = vrot.slane %v167, 4
    %v176 = vrot.slane %v167, 6
    %183 = vst [vmem:[#allocation2] sm:$0x3] %v164
    %184 = vst [vmem:[#allocation2 + $0x2] sm:$0x3] %v171
    %185 = vst [vmem:[#allocation2 + $0x4] sm:$0x3] %v172
    %186 = vst [vmem:[#allocation2 + $0x6] sm:$0x3] %v173
    %187 = vst [vmem:[#allocation2 + $0x8] sm:$0x3] %v167
    %188 = vst [vmem:[#allocation2 + $0xa] sm:$0x3] %v174
    %189 = vst [vmem:[#allocation2 + $0xc] sm:$0x3] %v175
    %190 = vst [vmem:[#allocation2 + $0xe] sm:$0x3] %v176
    %v191 = vld [vmem:[#allocation2] sm:$0x3]
    %vm192 = vcmask 261120
    %v194 = vsel %vm192, 0.0, 0
    %196 = vmatpush.msra.mxu0 0.0
    %197 = vmatpush.msra.mxu0 0.0
    %198 = vmatpush.msra.mxu0 0.0
    %199 = vmatpush.msra.mxu0 0.0
    %200 = vmatpush.msra.mxu0 0.0
    %201 = vmatpush.msra.mxu0 0.0
    %202 = vmatpush.msra.mxu0 0.0
    %203 = vmatpush.msra.mxu0 0.0
    %204 = vmatpush.msra.mxu0 0.0
    %205 = vmatpush.msra.mxu0 0.0
    %206 = vmatpush.msra.mxu0 0.0
    %207 = vmatpush.msra.mxu0 0.0
    %208 = vmatpush.msra.mxu0 %v132
    %209 = vmatpush.msra.mxu0 %v131
    %210 = vmatpush.msra.mxu0 %v130
    %211 = vmatpush.msra.mxu0 %v129
    %212 = vmatmul.f32.gmra.mxu0 %v194
    %v213 = vpop.f32.mrf.mxu0
    %v214 = vadd.f32 0.0, %v213
    %215 = vdwg.mxu0
    %v216 = vadd.f32 %v191, %v214
    %v217 = vxor.u32 %v216, 2147483648
    %v218 = vmul.f32 %v217, 1.442695
    %v219 = vpow.pop %v218
    %v220 = vadd.f32 %v219, 1.0
    %v221 = vrcp.pop %v220
    %v222 = vmul.f32 %v220, %v221
    %v223 = vsub.f32 1.0, %v222
    %v224 = vmul.f32 %v221, %v223
    %v225 = vadd.f32 %v221, %v224
    %vm226 = vweird.f32 %v220
    %vm227 = vweird.f32 %v221
    %vm228 = vmor %vm226, %vm227
    %v229 = vsel %vm228, %v221, %v225
    %v230 = vand.u32 2147483647, %v220
    %vm231 = vcmp.eq.f32.partialorder %v230, 8.507059e+37
    %v232 = vand.u32 %v220, 2147483648
    %v233 = vor.u32 1.1754944e-38, %v232
    %v234 = vsel %vm231, %v233, %v229
    %v235 = vmul.f32 1.0, %v234
    %v236 = vtanh.pop %v216
    %v237 = vmul.f32 %v235, 0.0
    %239 = vrot.lane.b32.xlu0 %v236, 32
    %v240 = vpop.permute.xlu0 %239
    %v242 = vmul.f32 %v235, %v240
    %244 = vrot.lane.b32.xlu0 %v242, 32
    %v245 = vpop.permute.xlu0 %244
    %v247 = vadd.f32 %v237, %v245
    %v248 = vtanh.pop %v247
    %250 = vrot.lane.b32.xlu0 %v248, 32
    %v251 = vpop.permute.xlu0 %250
    %v253 = vmul.f32 %v235, %v251
    %255 = vrot.lane.b32.xlu0 %v253, 64
    %v256 = vpop.permute.xlu0 %255
    %vm258 = vcmask 254976
    %259 = vst.msk [vmem:[#allocation3] sm:$0x3] %vm258, %v256
    %s260 = scalar_lea.vmem [#allocation2], 2
    %v261 = vld [vmem:[%s260] sm:$0x3]
    %v262 = vsel %vm192, %v256, 0
    %264 = vmatpush.msra.mxu0 0.0
    %265 = vmatpush.msra.mxu0 0.0
    %266 = vmatpush.msra.mxu0 0.0
    %267 = vmatpush.msra.mxu0 0.0
    %268 = vmatpush.msra.mxu0 0.0
    %269 = vmatpush.msra.mxu0 0.0
    %270 = vmatpush.msra.mxu0 0.0
    %271 = vmatpush.msra.mxu0 0.0
    %272 = vmatpush.msra.mxu0 0.0
    %273 = vmatpush.msra.mxu0 0.0
    %274 = vmatpush.msra.mxu0 0.0
    %275 = vmatpush.msra.mxu0 0.0
    %276 = vmatpush.msra.mxu0 %v132
    %277 = vmatpush.msra.mxu0 %v131
    %278 = vmatpush.msra.mxu0 %v130
    %279 = vmatpush.msra.mxu0 %v129
    %280 = vmatmul.f32.gmra.mxu0 %v262
    %v281 = vpop.f32.mrf.mxu0
    %v282 = vadd.f32 0.0, %v281
    %283 = vdwg.mxu0
    %v284 = vadd.f32 %v261, %v282
    %v285 = vxor.u32 %v284, 2147483648
    %v286 = vmul.f32 %v285, 1.442695
    %v287 = vpow.pop %v286
    %v288 = vadd.f32 %v287, 1.0
    %v289 = vrcp.pop %v288
    %v290 = vmul.f32 %v288, %v289
    %v291 = vsub.f32 1.0, %v290
    %v292 = vmul.f32 %v289, %v291
    %v293 = vadd.f32 %v289, %v292
    %vm294 = vweird.f32 %v288
    %vm295 = vweird.f32 %v289
    %vm296 = vmor %vm294, %vm295
    %v297 = vsel %vm296, %v289, %v293
    %v298 = vand.u32 2147483647, %v288
    %vm299 = vcmp.eq.f32.partialorder %v298, 8.507059e+37
    %v300 = vand.u32 %v288, 2147483648
    %v301 = vor.u32 1.1754944e-38, %v300
    %v302 = vsel %vm299, %v301, %v297
    %v303 = vmul.f32 1.0, %v302
    %v304 = vtanh.pop %v284
    %v305 = vmul.f32 %v303, %v247
    %307 = vrot.lane.b32.xlu0 %v304, 32
    %v308 = vpop.permute.xlu0 %307
    %v310 = vmul.f32 %v303, %v308
    %312 = vrot.lane.b32.xlu0 %v310, 32
    %v313 = vpop.permute.xlu0 %312
    %v315 = vadd.f32 %v305, %v313
    %v316 = vtanh.pop %v315
    %318 = vrot.lane.b32.xlu0 %v316, 32
    %v319 = vpop.permute.xlu0 %318
    %v321 = vmul.f32 %v303, %v319
    %323 = vrot.lane.b32.xlu0 %v321, 64
    %v324 = vpop.permute.xlu0 %323
    %s326 = scalar_lea.vmem [#allocation3], 2
    %327 = vst.msk [vmem:[%s326] sm:$0x3] %vm258, %v324
    %s328 = scalar_lea.vmem [#allocation2], 4
    %v329 = vld [vmem:[%s328] sm:$0x3]
    %v330 = vsel %vm192, %v324, 0
    %332 = vmatpush.msra.mxu0 0.0
    %333 = vmatpush.msra.mxu0 0.0
    %334 = vmatpush.msra.mxu0 0.0
    %335 = vmatpush.msra.mxu0 0.0
    %336 = vmatpush.msra.mxu0 0.0
    %337 = vmatpush.msra.mxu0 0.0
    %338 = vmatpush.msra.mxu0 0.0
    %339 = vmatpush.msra.mxu0 0.0
    %340 = vmatpush.msra.mxu0 0.0
    %341 = vmatpush.msra.mxu0 0.0
    %342 = vmatpush.msra.mxu0 0.0
    %343 = vmatpush.msra.mxu0 0.0
    %344 = vmatpush.msra.mxu0 %v132
    %345 = vmatpush.msra.mxu0 %v131
    %346 = vmatpush.msra.mxu0 %v130
    %347 = vmatpush.msra.mxu0 %v129
    %348 = vmatmul.f32.gmra.mxu0 %v330
    %v349 = vpop.f32.mrf.mxu0
    %v350 = vadd.f32 0.0, %v349
    %351 = vdwg.mxu0
    %v352 = vadd.f32 %v329, %v350
    %v353 = vxor.u32 %v352, 2147483648
    %v354 = vmul.f32 %v353, 1.442695
    %v355 = vpow.pop %v354
    %v356 = vadd.f32 %v355, 1.0
    %v357 = vrcp.pop %v356
    %v358 = vmul.f32 %v356, %v357
    %v359 = vsub.f32 1.0, %v358
    %v360 = vmul.f32 %v357, %v359
    %v361 = vadd.f32 %v357, %v360
    %vm362 = vweird.f32 %v356
    %vm363 = vweird.f32 %v357
    %vm364 = vmor %vm362, %vm363
    %v365 = vsel %vm364, %v357, %v361
    %v366 = vand.u32 2147483647, %v356
    %vm367 = vcmp.eq.f32.partialorder %v366, 8.507059e+37
    %v368 = vand.u32 %v356, 2147483648
    %v369 = vor.u32 1.1754944e-38, %v368
    %v370 = vsel %vm367, %v369, %v365
    %v371 = vmul.f32 1.0, %v370
    %v372 = vtanh.pop %v352
    %v373 = vmul.f32 %v371, %v315
    %375 = vrot.lane.b32.xlu0 %v372, 32
    %v376 = vpop.permute.xlu0 %375
    %v378 = vmul.f32 %v371, %v376
    %380 = vrot.lane.b32.xlu0 %v378, 32
    %v381 = vpop.permute.xlu0 %380
    %v383 = vadd.f32 %v373, %v381
    %v384 = vtanh.pop %v383
    %386 = vrot.lane.b32.xlu0 %v384, 32
    %v387 = vpop.permute.xlu0 %386
    %v389 = vmul.f32 %v371, %v387
    %391 = vrot.lane.b32.xlu0 %v389, 64
    %v392 = vpop.permute.xlu0 %391
    %s394 = scalar_lea.vmem [#allocation3], 4
    %395 = vst.msk [vmem:[%s394] sm:$0x3] %vm258, %v392
    %s396 = scalar_lea.vmem [#allocation2], 6
    %v397 = vld [vmem:[%s396] sm:$0x3]
    %v398 = vsel %vm192, %v392, 0
    %400 = vmatpush.msra.mxu0 0.0
    %401 = vmatpush.msra.mxu0 0.0
    %402 = vmatpush.msra.mxu0 0.0
    %403 = vmatpush.msra.mxu0 0.0
    %404 = vmatpush.msra.mxu0 0.0
    %405 = vmatpush.msra.mxu0 0.0
    %406 = vmatpush.msra.mxu0 0.0
    %407 = vmatpush.msra.mxu0 0.0
    %408 = vmatpush.msra.mxu0 0.0
    %409 = vmatpush.msra.mxu0 0.0
    %410 = vmatpush.msra.mxu0 0.0
    %411 = vmatpush.msra.mxu0 0.0
    %412 = vmatpush.msra.mxu0 %v132
    %413 = vmatpush.msra.mxu0 %v131
    %414 = vmatpush.msra.mxu0 %v130
    %415 = vmatpush.msra.mxu0 %v129
    %416 = vmatmul.f32.gmra.mxu0 %v398
    %v417 = vpop.f32.mrf.mxu0
    %v418 = vadd.f32 0.0, %v417
    %419 = vdwg.mxu0
    %v420 = vadd.f32 %v397, %v418
    %v421 = vxor.u32 %v420, 2147483648
    %v422 = vmul.f32 %v421, 1.442695
    %v423 = vpow.pop %v422
    %v424 = vadd.f32 %v423, 1.0
    %v425 = vrcp.pop %v424
    %v426 = vmul.f32 %v424, %v425
    %v427 = vsub.f32 1.0, %v426
    %v428 = vmul.f32 %v425, %v427
    %v429 = vadd.f32 %v425, %v428
    %vm430 = vweird.f32 %v424
    %vm431 = vweird.f32 %v425
    %vm432 = vmor %vm430, %vm431
    %v433 = vsel %vm432, %v425, %v429
    %v434 = vand.u32 2147483647, %v424
    %vm435 = vcmp.eq.f32.partialorder %v434, 8.507059e+37
    %v436 = vand.u32 %v424, 2147483648
    %v437 = vor.u32 1.1754944e-38, %v436
    %v438 = vsel %vm435, %v437, %v433
    %v439 = vmul.f32 1.0, %v438
    %v440 = vtanh.pop %v420
    %v441 = vmul.f32 %v439, %v383
    %443 = vrot.lane.b32.xlu0 %v440, 32
    %v444 = vpop.permute.xlu0 %443
    %v446 = vmul.f32 %v439, %v444
    %448 = vrot.lane.b32.xlu0 %v446, 32
    %v449 = vpop.permute.xlu0 %448
    %v451 = vadd.f32 %v441, %v449
    %v452 = vtanh.pop %v451
    %454 = vrot.lane.b32.xlu0 %v452, 32
    %v455 = vpop.permute.xlu0 %454
    %v457 = vmul.f32 %v439, %v455
    %459 = vrot.lane.b32.xlu0 %v457, 64
    %v460 = vpop.permute.xlu0 %459
    %s462 = scalar_lea.vmem [#allocation3], 6
    %463 = vst.msk [vmem:[%s462] sm:$0x3] %vm258, %v460
    %s464 = scalar_lea.vmem [#allocation2], 8
    %v465 = vld [vmem:[%s464] sm:$0x3]
    %v466 = vsel %vm192, %v460, 0
    %468 = vmatpush.msra.mxu0 0.0
    %469 = vmatpush.msra.mxu0 0.0
    %470 = vmatpush.msra.mxu0 0.0
    %471 = vmatpush.msra.mxu0 0.0
    %472 = vmatpush.msra.mxu0 0.0
    %473 = vmatpush.msra.mxu0 0.0
    %474 = vmatpush.msra.mxu0 0.0
    %475 = vmatpush.msra.mxu0 0.0
    %476 = vmatpush.msra.mxu0 0.0
    %477 = vmatpush.msra.mxu0 0.0
    %478 = vmatpush.msra.mxu0 0.0
    %479 = vmatpush.msra.mxu0 0.0
    %480 = vmatpush.msra.mxu0 %v132
    %481 = vmatpush.msra.mxu0 %v131
    %482 = vmatpush.msra.mxu0 %v130
    %483 = vmatpush.msra.mxu0 %v129
    %484 = vmatmul.f32.gmra.mxu0 %v466
    %v485 = vpop.f32.mrf.mxu0
    %v486 = vadd.f32 0.0, %v485
    %487 = vdwg.mxu0
    %v488 = vadd.f32 %v465, %v486
    %v489 = vxor.u32 %v488, 2147483648
    %v490 = vmul.f32 %v489, 1.442695
    %v491 = vpow.pop %v490
    %v492 = vadd.f32 %v491, 1.0
    %v493 = vrcp.pop %v492
    %v494 = vmul.f32 %v492, %v493
    %v495 = vsub.f32 1.0, %v494
    %v496 = vmul.f32 %v493, %v495
    %v497 = vadd.f32 %v493, %v496
    %vm498 = vweird.f32 %v492
    %vm499 = vweird.f32 %v493
    %vm500 = vmor %vm498, %vm499
    %v501 = vsel %vm500, %v493, %v497
    %v502 = vand.u32 2147483647, %v492
    %vm503 = vcmp.eq.f32.partialorder %v502, 8.507059e+37
    %v504 = vand.u32 %v492, 2147483648
    %v505 = vor.u32 1.1754944e-38, %v504
    %v506 = vsel %vm503, %v505, %v501
    %v507 = vmul.f32 1.0, %v506
    %v508 = vtanh.pop %v488
    %v509 = vmul.f32 %v507, %v451
    %511 = vrot.lane.b32.xlu0 %v508, 32
    %v512 = vpop.permute.xlu0 %511
    %v514 = vmul.f32 %v507, %v512
    %516 = vrot.lane.b32.xlu0 %v514, 32
    %v517 = vpop.permute.xlu0 %516
    %v519 = vadd.f32 %v509, %v517
    %v520 = vtanh.pop %v519
    %522 = vrot.lane.b32.xlu0 %v520, 32
    %v523 = vpop.permute.xlu0 %522
    %v525 = vmul.f32 %v507, %v523
    %527 = vrot.lane.b32.xlu0 %v525, 64
    %v528 = vpop.permute.xlu0 %527
    %s530 = scalar_lea.vmem [#allocation3], 8
    %531 = vst.msk [vmem:[%s530] sm:$0x3] %vm258, %v528
    %s532 = scalar_lea.vmem [#allocation2], 10
    %v533 = vld [vmem:[%s532] sm:$0x3]
    %v534 = vsel %vm192, %v528, 0
    %536 = vmatpush.msra.mxu0 0.0
    %537 = vmatpush.msra.mxu0 0.0
    %538 = vmatpush.msra.mxu0 0.0
    %539 = vmatpush.msra.mxu0 0.0
    %540 = vmatpush.msra.mxu0 0.0
    %541 = vmatpush.msra.mxu0 0.0
    %542 = vmatpush.msra.mxu0 0.0
    %543 = vmatpush.msra.mxu0 0.0
    %544 = vmatpush.msra.mxu0 0.0
    %545 = vmatpush.msra.mxu0 0.0
    %546 = vmatpush.msra.mxu0 0.0
    %547 = vmatpush.msra.mxu0 0.0
    %548 = vmatpush.msra.mxu0 %v132
    %549 = vmatpush.msra.mxu0 %v131
    %550 = vmatpush.msra.mxu0 %v130
    %551 = vmatpush.msra.mxu0 %v129
    %552 = vmatmul.f32.gmra.mxu0 %v534
    %v553 = vpop.f32.mrf.mxu0
    %v554 = vadd.f32 0.0, %v553
    %555 = vdwg.mxu0
    %v556 = vadd.f32 %v533, %v554
    %v557 = vxor.u32 %v556, 2147483648
    %v558 = vmul.f32 %v557, 1.442695
    %v559 = vpow.pop %v558
    %v560 = vadd.f32 %v559, 1.0
    %v561 = vrcp.pop %v560
    %v562 = vmul.f32 %v560, %v561
    %v563 = vsub.f32 1.0, %v562
    %v564 = vmul.f32 %v561, %v563
    %v565 = vadd.f32 %v561, %v564
    %vm566 = vweird.f32 %v560
    %vm567 = vweird.f32 %v561
    %vm568 = vmor %vm566, %vm567
    %v569 = vsel %vm568, %v561, %v565
    %v570 = vand.u32 2147483647, %v560
    %vm571 = vcmp.eq.f32.partialorder %v570, 8.507059e+37
    %v572 = vand.u32 %v560, 2147483648
    %v573 = vor.u32 1.1754944e-38, %v572
    %v574 = vsel %vm571, %v573, %v569
    %v575 = vmul.f32 1.0, %v574
    %v576 = vtanh.pop %v556
    %v577 = vmul.f32 %v575, %v519
    %579 = vrot.lane.b32.xlu0 %v576, 32
    %v580 = vpop.permute.xlu0 %579
    %v582 = vmul.f32 %v575, %v580
    %584 = vrot.lane.b32.xlu0 %v582, 32
    %v585 = vpop.permute.xlu0 %584
    %v587 = vadd.f32 %v577, %v585
    %v588 = vtanh.pop %v587
    %590 = vrot.lane.b32.xlu0 %v588, 32
    %v591 = vpop.permute.xlu0 %590
    %v593 = vmul.f32 %v575, %v591
    %595 = vrot.lane.b32.xlu0 %v593, 64
    %v596 = vpop.permute.xlu0 %595
    %s598 = scalar_lea.vmem [#allocation3], 10
    %599 = vst.msk [vmem:[%s598] sm:$0x3] %vm258, %v596
    %s600 = scalar_lea.vmem [#allocation2], 12
    %v601 = vld [vmem:[%s600] sm:$0x3]
    %v602 = vsel %vm192, %v596, 0
    %604 = vmatpush.msra.mxu0 0.0
    %605 = vmatpush.msra.mxu0 0.0
    %606 = vmatpush.msra.mxu0 0.0
    %607 = vmatpush.msra.mxu0 0.0
    %608 = vmatpush.msra.mxu0 0.0
    %609 = vmatpush.msra.mxu0 0.0
    %610 = vmatpush.msra.mxu0 0.0
    %611 = vmatpush.msra.mxu0 0.0
    %612 = vmatpush.msra.mxu0 0.0
    %613 = vmatpush.msra.mxu0 0.0
    %614 = vmatpush.msra.mxu0 0.0
    %615 = vmatpush.msra.mxu0 0.0
    %616 = vmatpush.msra.mxu0 %v132
    %617 = vmatpush.msra.mxu0 %v131
    %618 = vmatpush.msra.mxu0 %v130
    %619 = vmatpush.msra.mxu0 %v129
    %620 = vmatmul.f32.gmra.mxu0 %v602
    %v621 = vpop.f32.mrf.mxu0
    %v622 = vadd.f32 0.0, %v621
    %623 = vdwg.mxu0
    %v624 = vadd.f32 %v601, %v622
    %v625 = vxor.u32 %v624, 2147483648
    %v626 = vmul.f32 %v625, 1.442695
    %v627 = vpow.pop %v626
    %v628 = vadd.f32 %v627, 1.0
    %v629 = vrcp.pop %v628
    %v630 = vmul.f32 %v628, %v629
    %v631 = vsub.f32 1.0, %v630
    %v632 = vmul.f32 %v629, %v631
    %v633 = vadd.f32 %v629, %v632
    %vm634 = vweird.f32 %v628
    %vm635 = vweird.f32 %v629
    %vm636 = vmor %vm634, %vm635
    %v637 = vsel %vm636, %v629, %v633
    %v638 = vand.u32 2147483647, %v628
    %vm639 = vcmp.eq.f32.partialorder %v638, 8.507059e+37
    %v640 = vand.u32 %v628, 2147483648
    %v641 = vor.u32 1.1754944e-38, %v640
    %v642 = vsel %vm639, %v641, %v637
    %v643 = vmul.f32 1.0, %v642
    %v644 = vtanh.pop %v624
    %v645 = vmul.f32 %v643, %v587
    %647 = vrot.lane.b32.xlu0 %v644, 32
    %v648 = vpop.permute.xlu0 %647
    %v650 = vmul.f32 %v643, %v648
    %652 = vrot.lane.b32.xlu0 %v650, 32
    %v653 = vpop.permute.xlu0 %652
    %v655 = vadd.f32 %v645, %v653
    %v656 = vtanh.pop %v655
    %658 = vrot.lane.b32.xlu0 %v656, 32
    %v659 = vpop.permute.xlu0 %658
    %v661 = vmul.f32 %v643, %v659
    %663 = vrot.lane.b32.xlu0 %v661, 64
    %v664 = vpop.permute.xlu0 %663
    %s666 = scalar_lea.vmem [#allocation3], 12
    %667 = vst.msk [vmem:[%s666] sm:$0x3] %vm258, %v664
    %s668 = scalar_lea.vmem [#allocation2], 14
    %v669 = vld [vmem:[%s668] sm:$0x3]
    %v670 = vsel %vm192, %v664, 0
    %672 = vmatpush.msra.mxu0 0.0
    %673 = vmatpush.msra.mxu0 0.0
    %674 = vmatpush.msra.mxu0 0.0
    %675 = vmatpush.msra.mxu0 0.0
    %676 = vmatpush.msra.mxu0 0.0
    %677 = vmatpush.msra.mxu0 0.0
    %678 = vmatpush.msra.mxu0 0.0
    %679 = vmatpush.msra.mxu0 0.0
    %680 = vmatpush.msra.mxu0 0.0
    %681 = vmatpush.msra.mxu0 0.0
    %682 = vmatpush.msra.mxu0 0.0
    %683 = vmatpush.msra.mxu0 0.0
    %684 = vmatpush.msra.mxu0 %v132
    %685 = vmatpush.msra.mxu0 %v131
    %686 = vmatpush.msra.mxu0 %v130
    %687 = vmatpush.msra.mxu0 %v129
    %688 = vmatmul.f32.gmra.mxu0 %v670
    %v689 = vpop.f32.mrf.mxu0
    %v690 = vadd.f32 0.0, %v689
    %691 = vdwg.mxu0
    %v692 = vadd.f32 %v669, %v690
    %v693 = vxor.u32 %v692, 2147483648
    %v694 = vmul.f32 %v693, 1.442695
    %v695 = vpow.pop %v694
    %v696 = vadd.f32 %v695, 1.0
    %v697 = vrcp.pop %v696
    %v698 = vmul.f32 %v696, %v697
    %v699 = vsub.f32 1.0, %v698
    %v700 = vmul.f32 %v697, %v699
    %v701 = vadd.f32 %v697, %v700
    %vm702 = vweird.f32 %v696
    %vm703 = vweird.f32 %v697
    %vm704 = vmor %vm702, %vm703
    %v705 = vsel %vm704, %v697, %v701
    %v706 = vand.u32 2147483647, %v696
    %vm707 = vcmp.eq.f32.partialorder %v706, 8.507059e+37
    %v708 = vand.u32 %v696, 2147483648
    %v709 = vor.u32 1.1754944e-38, %v708
    %v710 = vsel %vm707, %v709, %v705
    %v711 = vmul.f32 1.0, %v710
    %v712 = vtanh.pop %v692
    %v713 = vmul.f32 %v711, %v655
    %715 = vrot.lane.b32.xlu0 %v712, 32
    %v716 = vpop.permute.xlu0 %715
    %v718 = vmul.f32 %v711, %v716
    %720 = vrot.lane.b32.xlu0 %v718, 32
    %v721 = vpop.permute.xlu0 %720
    %v723 = vadd.f32 %v713, %v721
    %v724 = vtanh.pop %v723
    %726 = vrot.lane.b32.xlu0 %v724, 32
    %v727 = vpop.permute.xlu0 %726
    %v729 = vmul.f32 %v711, %v727
    %731 = vrot.lane.b32.xlu0 %v729, 64
    %v732 = vpop.permute.xlu0 %731
    %s734 = scalar_lea.vmem [#allocation3], 14
    %735 = vst.msk [vmem:[%s734] sm:$0x3] %vm258, %v732
    %v736 = vld [vmem:[#allocation10] sm:$0xff]
    %v737 = vld [vmem:[#allocation10 + $0x8] sm:$0xff]
    %v738 = vld [vmem:[#allocation10 + $0x10] sm:$0xff]
    %v739 = vld [vmem:[#allocation10 + $0x18] sm:$0xff]
    %v740 = vld [vmem:[#allocation12] sm:$0xff]
    %v741 = vld [vmem:[#allocation12 + $0x8] sm:$0xff]
    %v742 = vld [vmem:[#allocation12 + $0x10] sm:$0xff]
    %v743 = vld [vmem:[#allocation12 + $0x18] sm:$0xff]
    %v744 = vld [vmem:[%s6] sm:$0x1]
    %v745 = vld [vmem:[#allocation3] sm:$0x3]
    %v746 = vld [vmem:[#allocation3 + $0x2] sm:$0x3]
    %v747 = vld [vmem:[#allocation3 + $0x4] sm:$0x3]
    %v748 = vld [vmem:[#allocation3 + $0x6] sm:$0x3]
    %v749 = vld [vmem:[#allocation3 + $0x8] sm:$0x3]
    %v750 = vld [vmem:[#allocation3 + $0xa] sm:$0x3]
    %v751 = vld [vmem:[#allocation3 + $0xc] sm:$0x3]
    %v752 = vld [vmem:[#allocation3 + $0xe] sm:$0x3]
    %v754 = vperm.slane %v744, 0
    %764 = vst [vmem:[#allocation1] ss:$4 sm:$0xff] %v745
    %s765 = scalar_lea.vmem [#allocation1], 1
    %766 = vst [vmem:[%s765] ss:$4 sm:$0xff] %v746
    %s767 = scalar_lea.vmem [#allocation1], 2
    %768 = vst [vmem:[%s767] ss:$4 sm:$0xff] %v747
    %s769 = scalar_lea.vmem [#allocation1], 3
    %770 = vst [vmem:[%s769] ss:$4 sm:$0xff] %v748
    %s771 = scalar_lea.vmem [#allocation1], 32
    %772 = vst [vmem:[%s771] ss:$4 sm:$0xff] %v749
    %s773 = scalar_lea.vmem [#allocation1], 33
    %774 = vst [vmem:[%s773] ss:$4 sm:$0xff] %v750
    %s775 = scalar_lea.vmem [#allocation1], 34
    %776 = vst [vmem:[%s775] ss:$4 sm:$0xff] %v751
    %s777 = scalar_lea.vmem [#allocation1], 35
    %778 = vst [vmem:[%s777] ss:$4 sm:$0xff] %v752
    %v779 = vld.sshfl [vmem:[#allocation1] sm:$0xff pattern:$0x73625140]
    %v780 = vld.sshfl [vmem:[#allocation1 + $0x20] sm:$0xff pattern:$0x73625140]
    %v781 = vsel %vm192, %v779, 0
    %v783 = vsel %vm192, %v780, 0
    %785 = vmatpush.msra.mxu0 0.0
    %786 = vmatpush.msra.mxu0 0.0
    %787 = vmatpush.msra.mxu0 0.0
    %788 = vmatpush.msra.mxu0 0.0
    %789 = vmatpush.msra.mxu0 0.0
    %790 = vmatpush.msra.mxu0 0.0
    %791 = vmatpush.msra.mxu0 0.0
    %792 = vmatpush.msra.mxu0 0.0
    %793 = vmatpush.msra.mxu0 0.0
    %794 = vmatpush.msra.mxu0 0.0
    %795 = vmatpush.msra.mxu0 0.0
    %796 = vmatpush.msra.mxu0 0.0
    %797 = vmatpush.msra.mxu0 %v739
    %798 = vmatpush.msra.mxu0 %v738
    %799 = vmatpush.msra.mxu0 %v737
    %800 = vmatpush.msra.mxu0 %v736
    %801 = vmatmul.f32.gmra.mxu0 %v781
    %v802 = vpop.f32.mrf.mxu0
    %v803 = vadd.f32 %v754, %v802
    %804 = vmatmul.f32.gmra.mxu0 %v783
    %v805 = vpop.f32.mrf.mxu0
    %v806 = vadd.f32 %v754, %v805
    %807 = vdwg.mxu0
    %v810 = vrot.slane %v803, 2
    %v811 = vrot.slane %v803, 4
    %v812 = vrot.slane %v803, 6
    %v813 = vrot.slane %v806, 2
    %v814 = vrot.slane %v806, 4
    %v815 = vrot.slane %v806, 6
    %822 = vst [vmem:[#allocation2] sm:$0x3] %v803
    %823 = vst [vmem:[#allocation2 + $0x2] sm:$0x3] %v810
    %824 = vst [vmem:[#allocation2 + $0x4] sm:$0x3] %v811
    %825 = vst [vmem:[#allocation2 + $0x6] sm:$0x3] %v812
    %826 = vst [vmem:[#allocation2 + $0x8] sm:$0x3] %v806
    %827 = vst [vmem:[#allocation2 + $0xa] sm:$0x3] %v813
    %828 = vst [vmem:[#allocation2 + $0xc] sm:$0x3] %v814
    %829 = vst [vmem:[#allocation2 + $0xe] sm:$0x3] %v815
    %v830 = vld [vmem:[#allocation2] sm:$0x3]
    %831 = vmatpush.msra.mxu0 0.0
    %832 = vmatpush.msra.mxu0 0.0
    %833 = vmatpush.msra.mxu0 0.0
    %834 = vmatpush.msra.mxu0 0.0
    %835 = vmatpush.msra.mxu0 0.0
    %836 = vmatpush.msra.mxu0 0.0
    %837 = vmatpush.msra.mxu0 0.0
    %838 = vmatpush.msra.mxu0 0.0
    %839 = vmatpush.msra.mxu0 0.0
    %840 = vmatpush.msra.mxu0 0.0
    %841 = vmatpush.msra.mxu0 0.0
    %842 = vmatpush.msra.mxu0 0.0
    %843 = vmatpush.msra.mxu0 %v743
    %844 = vmatpush.msra.mxu0 %v742
    %845 = vmatpush.msra.mxu0 %v741
    %846 = vmatpush.msra.mxu0 %v740
    %847 = vmatmul.f32.gmra.mxu0 %v194
    %v848 = vpop.f32.mrf.mxu0
    %v849 = vadd.f32 0.0, %v848
    %850 = vdwg.mxu0
    %v851 = vadd.f32 %v830, %v849
    %v852 = vxor.u32 %v851, 2147483648
    %v853 = vmul.f32 %v852, 1.442695
    %v854 = vpow.pop %v853
    %v855 = vadd.f32 %v854, 1.0
    %v856 = vrcp.pop %v855
    %v857 = vmul.f32 %v855, %v856
    %v858 = vsub.f32 1.0, %v857
    %v859 = vmul.f32 %v856, %v858
    %v860 = vadd.f32 %v856, %v859
    %vm861 = vweird.f32 %v855
    %vm862 = vweird.f32 %v856
    %vm863 = vmor %vm861, %vm862
    %v864 = vsel %vm863, %v856, %v860
    %v865 = vand.u32 2147483647, %v855
    %vm866 = vcmp.eq.f32.partialorder %v865, 8.507059e+37
    %v867 = vand.u32 %v855, 2147483648
    %v868 = vor.u32 1.1754944e-38, %v867
    %v869 = vsel %vm866, %v868, %v864
    %v870 = vmul.f32 1.0, %v869
    %v871 = vtanh.pop %v851
    %v872 = vmul.f32 %v870, 0.0
    %874 = vrot.lane.b32.xlu0 %v871, 32
    %v875 = vpop.permute.xlu0 %874
    %v877 = vmul.f32 %v870, %v875
    %879 = vrot.lane.b32.xlu0 %v877, 32
    %v880 = vpop.permute.xlu0 %879
    %v882 = vadd.f32 %v872, %v880
    %v883 = vtanh.pop %v882
    %885 = vrot.lane.b32.xlu0 %v883, 32
    %v886 = vpop.permute.xlu0 %885
    %v888 = vmul.f32 %v870, %v886
    %v889 = vld [vmem:[%s260] sm:$0x3]
    %891 = vrot.lane.b32.xlu0 %v888, 64
    %v892 = vpop.permute.xlu0 %891
    %v893 = vsel %vm192, %v892, 0
    %895 = vmatpush.msra.mxu0 0.0
    %896 = vmatpush.msra.mxu0 0.0
    %897 = vmatpush.msra.mxu0 0.0
    %898 = vmatpush.msra.mxu0 0.0
    %899 = vmatpush.msra.mxu0 0.0
    %900 = vmatpush.msra.mxu0 0.0
    %901 = vmatpush.msra.mxu0 0.0
    %902 = vmatpush.msra.mxu0 0.0
    %903 = vmatpush.msra.mxu0 0.0
    %904 = vmatpush.msra.mxu0 0.0
    %905 = vmatpush.msra.mxu0 0.0
    %906 = vmatpush.msra.mxu0 0.0
    %907 = vmatpush.msra.mxu0 %v743
    %908 = vmatpush.msra.mxu0 %v742
    %909 = vmatpush.msra.mxu0 %v741
    %910 = vmatpush.msra.mxu0 %v740
    %911 = vmatmul.f32.gmra.mxu0 %v893
    %v912 = vpop.f32.mrf.mxu0
    %v913 = vadd.f32 0.0, %v912
    %914 = vdwg.mxu0
    %v915 = vadd.f32 %v889, %v913
    %v916 = vxor.u32 %v915, 2147483648
    %v917 = vmul.f32 %v916, 1.442695
    %v918 = vpow.pop %v917
    %v919 = vadd.f32 %v918, 1.0
    %v920 = vrcp.pop %v919
    %v921 = vmul.f32 %v919, %v920
    %v922 = vsub.f32 1.0, %v921
    %v923 = vmul.f32 %v920, %v922
    %v924 = vadd.f32 %v920, %v923
    %vm925 = vweird.f32 %v919
    %vm926 = vweird.f32 %v920
    %vm927 = vmor %vm925, %vm926
    %v928 = vsel %vm927, %v920, %v924
    %v929 = vand.u32 2147483647, %v919
    %vm930 = vcmp.eq.f32.partialorder %v929, 8.507059e+37
    %v931 = vand.u32 %v919, 2147483648
    %v932 = vor.u32 1.1754944e-38, %v931
    %v933 = vsel %vm930, %v932, %v928
    %v934 = vmul.f32 1.0, %v933
    %v935 = vtanh.pop %v915
    %v936 = vmul.f32 %v934, %v882
    %938 = vrot.lane.b32.xlu0 %v935, 32
    %v939 = vpop.permute.xlu0 %938
    %v941 = vmul.f32 %v934, %v939
    %943 = vrot.lane.b32.xlu0 %v941, 32
    %v944 = vpop.permute.xlu0 %943
    %v946 = vadd.f32 %v936, %v944
    %v947 = vtanh.pop %v946
    %949 = vrot.lane.b32.xlu0 %v947, 32
    %v950 = vpop.permute.xlu0 %949
    %v952 = vmul.f32 %v934, %v950
    %v953 = vld [vmem:[%s328] sm:$0x3]
    %955 = vrot.lane.b32.xlu0 %v952, 64
    %v956 = vpop.permute.xlu0 %955
    %v957 = vsel %vm192, %v956, 0
    %959 = vmatpush.msra.mxu0 0.0
    %960 = vmatpush.msra.mxu0 0.0
    %961 = vmatpush.msra.mxu0 0.0
    %962 = vmatpush.msra.mxu0 0.0
    %963 = vmatpush.msra.mxu0 0.0
    %964 = vmatpush.msra.mxu0 0.0
    %965 = vmatpush.msra.mxu0 0.0
    %966 = vmatpush.msra.mxu0 0.0
    %967 = vmatpush.msra.mxu0 0.0
    %968 = vmatpush.msra.mxu0 0.0
    %969 = vmatpush.msra.mxu0 0.0
    %970 = vmatpush.msra.mxu0 0.0
    %971 = vmatpush.msra.mxu0 %v743
    %972 = vmatpush.msra.mxu0 %v742
    %973 = vmatpush.msra.mxu0 %v741
    %974 = vmatpush.msra.mxu0 %v740
    %975 = vmatmul.f32.gmra.mxu0 %v957
    %v976 = vpop.f32.mrf.mxu0
    %v977 = vadd.f32 0.0, %v976
    %978 = vdwg.mxu0
    %v979 = vadd.f32 %v953, %v977
    %v980 = vxor.u32 %v979, 2147483648
    %v981 = vmul.f32 %v980, 1.442695
    %v982 = vpow.pop %v981
    %v983 = vadd.f32 %v982, 1.0
    %v984 = vrcp.pop %v983
    %v985 = vmul.f32 %v983, %v984
    %v986 = vsub.f32 1.0, %v985
    %v987 = vmul.f32 %v984, %v986
    %v988 = vadd.f32 %v984, %v987
    %vm989 = vweird.f32 %v983
    %vm990 = vweird.f32 %v984
    %vm991 = vmor %vm989, %vm990
    %v992 = vsel %vm991, %v984, %v988
    %v993 = vand.u32 2147483647, %v983
    %vm994 = vcmp.eq.f32.partialorder %v993, 8.507059e+37
    %v995 = vand.u32 %v983, 2147483648
    %v996 = vor.u32 1.1754944e-38, %v995
    %v997 = vsel %vm994, %v996, %v992
    %v998 = vmul.f32 1.0, %v997
    %v999 = vtanh.pop %v979
    %v1000 = vmul.f32 %v998, %v946
    %1002 = vrot.lane.b32.xlu0 %v999, 32
    %v1003 = vpop.permute.xlu0 %1002
    %v1005 = vmul.f32 %v998, %v1003
    %1007 = vrot.lane.b32.xlu0 %v1005, 32
    %v1008 = vpop.permute.xlu0 %1007
    %v1010 = vadd.f32 %v1000, %v1008
    %v1011 = vtanh.pop %v1010
    %1013 = vrot.lane.b32.xlu0 %v1011, 32
    %v1014 = vpop.permute.xlu0 %1013
    %v1016 = vmul.f32 %v998, %v1014
    %v1017 = vld [vmem:[%s396] sm:$0x3]
    %1019 = vrot.lane.b32.xlu0 %v1016, 64
    %v1020 = vpop.permute.xlu0 %1019
    %v1021 = vsel %vm192, %v1020, 0
    %1023 = vmatpush.msra.mxu0 0.0
    %1024 = vmatpush.msra.mxu0 0.0
    %1025 = vmatpush.msra.mxu0 0.0
    %1026 = vmatpush.msra.mxu0 0.0
    %1027 = vmatpush.msra.mxu0 0.0
    %1028 = vmatpush.msra.mxu0 0.0
    %1029 = vmatpush.msra.mxu0 0.0
    %1030 = vmatpush.msra.mxu0 0.0
    %1031 = vmatpush.msra.mxu0 0.0
    %1032 = vmatpush.msra.mxu0 0.0
    %1033 = vmatpush.msra.mxu0 0.0
    %1034 = vmatpush.msra.mxu0 0.0
    %1035 = vmatpush.msra.mxu0 %v743
    %1036 = vmatpush.msra.mxu0 %v742
    %1037 = vmatpush.msra.mxu0 %v741
    %1038 = vmatpush.msra.mxu0 %v740
    %1039 = vmatmul.f32.gmra.mxu0 %v1021
    %v1040 = vpop.f32.mrf.mxu0
    %v1041 = vadd.f32 0.0, %v1040
    %1042 = vdwg.mxu0
    %v1043 = vadd.f32 %v1017, %v1041
    %v1044 = vxor.u32 %v1043, 2147483648
    %v1045 = vmul.f32 %v1044, 1.442695
    %v1046 = vpow.pop %v1045
    %v1047 = vadd.f32 %v1046, 1.0
    %v1048 = vrcp.pop %v1047
    %v1049 = vmul.f32 %v1047, %v1048
    %v1050 = vsub.f32 1.0, %v1049
    %v1051 = vmul.f32 %v1048, %v1050
    %v1052 = vadd.f32 %v1048, %v1051
    %vm1053 = vweird.f32 %v1047
    %vm1054 = vweird.f32 %v1048
    %vm1055 = vmor %vm1053, %vm1054
    %v1056 = vsel %vm1055, %v1048, %v1052
    %v1057 = vand.u32 2147483647, %v1047
    %vm1058 = vcmp.eq.f32.partialorder %v1057, 8.507059e+37
    %v1059 = vand.u32 %v1047, 2147483648
    %v1060 = vor.u32 1.1754944e-38, %v1059
    %v1061 = vsel %vm1058, %v1060, %v1056
    %v1062 = vmul.f32 1.0, %v1061
    %v1063 = vtanh.pop %v1043
    %v1064 = vmul.f32 %v1062, %v1010
    %1066 = vrot.lane.b32.xlu0 %v1063, 32
    %v1067 = vpop.permute.xlu0 %1066
    %v1069 = vmul.f32 %v1062, %v1067
    %1071 = vrot.lane.b32.xlu0 %v1069, 32
    %v1072 = vpop.permute.xlu0 %1071
    %v1074 = vadd.f32 %v1064, %v1072
    %v1075 = vtanh.pop %v1074
    %1077 = vrot.lane.b32.xlu0 %v1075, 32
    %v1078 = vpop.permute.xlu0 %1077
    %v1080 = vmul.f32 %v1062, %v1078
    %v1081 = vld [vmem:[%s464] sm:$0x3]
    %1083 = vrot.lane.b32.xlu0 %v1080, 64
    %v1084 = vpop.permute.xlu0 %1083
    %v1085 = vsel %vm192, %v1084, 0
    %1087 = vmatpush.msra.mxu0 0.0
    %1088 = vmatpush.msra.mxu0 0.0
    %1089 = vmatpush.msra.mxu0 0.0
    %1090 = vmatpush.msra.mxu0 0.0
    %1091 = vmatpush.msra.mxu0 0.0
    %1092 = vmatpush.msra.mxu0 0.0
    %1093 = vmatpush.msra.mxu0 0.0
    %1094 = vmatpush.msra.mxu0 0.0
    %1095 = vmatpush.msra.mxu0 0.0
    %1096 = vmatpush.msra.mxu0 0.0
    %1097 = vmatpush.msra.mxu0 0.0
    %1098 = vmatpush.msra.mxu0 0.0
    %1099 = vmatpush.msra.mxu0 %v743
    %1100 = vmatpush.msra.mxu0 %v742
    %1101 = vmatpush.msra.mxu0 %v741
    %1102 = vmatpush.msra.mxu0 %v740
    %1103 = vmatmul.f32.gmra.mxu0 %v1085
    %v1104 = vpop.f32.mrf.mxu0
    %v1105 = vadd.f32 0.0, %v1104
    %1106 = vdwg.mxu0
    %v1107 = vadd.f32 %v1081, %v1105
    %v1108 = vxor.u32 %v1107, 2147483648
    %v1109 = vmul.f32 %v1108, 1.442695
    %v1110 = vpow.pop %v1109
    %v1111 = vadd.f32 %v1110, 1.0
    %v1112 = vrcp.pop %v1111
    %v1113 = vmul.f32 %v1111, %v1112
    %v1114 = vsub.f32 1.0, %v1113
    %v1115 = vmul.f32 %v1112, %v1114
    %v1116 = vadd.f32 %v1112, %v1115
    %vm1117 = vweird.f32 %v1111
    %vm1118 = vweird.f32 %v1112
    %vm1119 = vmor %vm1117, %vm1118
    %v1120 = vsel %vm1119, %v1112, %v1116
    %v1121 = vand.u32 2147483647, %v1111
    %vm1122 = vcmp.eq.f32.partialorder %v1121, 8.507059e+37
    %v1123 = vand.u32 %v1111, 2147483648
    %v1124 = vor.u32 1.1754944e-38, %v1123
    %v1125 = vsel %vm1122, %v1124, %v1120
    %v1126 = vmul.f32 1.0, %v1125
    %v1127 = vtanh.pop %v1107
    %v1128 = vmul.f32 %v1126, %v1074
    %1130 = vrot.lane.b32.xlu0 %v1127, 32
    %v1131 = vpop.permute.xlu0 %1130
    %v1133 = vmul.f32 %v1126, %v1131
    %1135 = vrot.lane.b32.xlu0 %v1133, 32
    %v1136 = vpop.permute.xlu0 %1135
    %v1138 = vadd.f32 %v1128, %v1136
    %v1139 = vtanh.pop %v1138
    %1141 = vrot.lane.b32.xlu0 %v1139, 32
    %v1142 = vpop.permute.xlu0 %1141
    %v1144 = vmul.f32 %v1126, %v1142
    %v1145 = vld [vmem:[%s532] sm:$0x3]
    %1147 = vrot.lane.b32.xlu0 %v1144, 64
    %v1148 = vpop.permute.xlu0 %1147
    %v1149 = vsel %vm192, %v1148, 0
    %1151 = vmatpush.msra.mxu0 0.0
    %1152 = vmatpush.msra.mxu0 0.0
    %1153 = vmatpush.msra.mxu0 0.0
    %1154 = vmatpush.msra.mxu0 0.0
    %1155 = vmatpush.msra.mxu0 0.0
    %1156 = vmatpush.msra.mxu0 0.0
    %1157 = vmatpush.msra.mxu0 0.0
    %1158 = vmatpush.msra.mxu0 0.0
    %1159 = vmatpush.msra.mxu0 0.0
    %1160 = vmatpush.msra.mxu0 0.0
    %1161 = vmatpush.msra.mxu0 0.0
    %1162 = vmatpush.msra.mxu0 0.0
    %1163 = vmatpush.msra.mxu0 %v743
    %1164 = vmatpush.msra.mxu0 %v742
    %1165 = vmatpush.msra.mxu0 %v741
    %1166 = vmatpush.msra.mxu0 %v740
    %1167 = vmatmul.f32.gmra.mxu0 %v1149
    %v1168 = vpop.f32.mrf.mxu0
    %v1169 = vadd.f32 0.0, %v1168
    %1170 = vdwg.mxu0
    %v1171 = vadd.f32 %v1145, %v1169
    %v1172 = vxor.u32 %v1171, 2147483648
    %v1173 = vmul.f32 %v1172, 1.442695
    %v1174 = vpow.pop %v1173
    %v1175 = vadd.f32 %v1174, 1.0
    %v1176 = vrcp.pop %v1175
    %v1177 = vmul.f32 %v1175, %v1176
    %v1178 = vsub.f32 1.0, %v1177
    %v1179 = vmul.f32 %v1176, %v1178
    %v1180 = vadd.f32 %v1176, %v1179
    %vm1181 = vweird.f32 %v1175
    %vm1182 = vweird.f32 %v1176
    %vm1183 = vmor %vm1181, %vm1182
    %v1184 = vsel %vm1183, %v1176, %v1180
    %v1185 = vand.u32 2147483647, %v1175
    %vm1186 = vcmp.eq.f32.partialorder %v1185, 8.507059e+37
    %v1187 = vand.u32 %v1175, 2147483648
    %v1188 = vor.u32 1.1754944e-38, %v1187
    %v1189 = vsel %vm1186, %v1188, %v1184
    %v1190 = vmul.f32 1.0, %v1189
    %v1191 = vtanh.pop %v1171
    %v1192 = vmul.f32 %v1190, %v1138
    %1194 = vrot.lane.b32.xlu0 %v1191, 32
    %v1195 = vpop.permute.xlu0 %1194
    %v1197 = vmul.f32 %v1190, %v1195
    %1199 = vrot.lane.b32.xlu0 %v1197, 32
    %v1200 = vpop.permute.xlu0 %1199
    %v1202 = vadd.f32 %v1192, %v1200
    %v1203 = vtanh.pop %v1202
    %1205 = vrot.lane.b32.xlu0 %v1203, 32
    %v1206 = vpop.permute.xlu0 %1205
    %v1208 = vmul.f32 %v1190, %v1206
    %v1209 = vld [vmem:[%s600] sm:$0x3]
    %1211 = vrot.lane.b32.xlu0 %v1208, 64
    %v1212 = vpop.permute.xlu0 %1211
    %v1213 = vsel %vm192, %v1212, 0
    %1215 = vmatpush.msra.mxu0 0.0
    %1216 = vmatpush.msra.mxu0 0.0
    %1217 = vmatpush.msra.mxu0 0.0
    %1218 = vmatpush.msra.mxu0 0.0
    %1219 = vmatpush.msra.mxu0 0.0
    %1220 = vmatpush.msra.mxu0 0.0
    %1221 = vmatpush.msra.mxu0 0.0
    %1222 = vmatpush.msra.mxu0 0.0
    %1223 = vmatpush.msra.mxu0 0.0
    %1224 = vmatpush.msra.mxu0 0.0
    %1225 = vmatpush.msra.mxu0 0.0
    %1226 = vmatpush.msra.mxu0 0.0
    %1227 = vmatpush.msra.mxu0 %v743
    %1228 = vmatpush.msra.mxu0 %v742
    %1229 = vmatpush.msra.mxu0 %v741
    %1230 = vmatpush.msra.mxu0 %v740
    %1231 = vmatmul.f32.gmra.mxu0 %v1213
    %v1232 = vpop.f32.mrf.mxu0
    %v1233 = vadd.f32 0.0, %v1232
    %1234 = vdwg.mxu0
    %v1235 = vadd.f32 %v1209, %v1233
    %v1236 = vxor.u32 %v1235, 2147483648
    %v1237 = vmul.f32 %v1236, 1.442695
    %v1238 = vpow.pop %v1237
    %v1239 = vadd.f32 %v1238, 1.0
    %v1240 = vrcp.pop %v1239
    %v1241 = vmul.f32 %v1239, %v1240
    %v1242 = vsub.f32 1.0, %v1241
    %v1243 = vmul.f32 %v1240, %v1242
    %v1244 = vadd.f32 %v1240, %v1243
    %vm1245 = vweird.f32 %v1239
    %vm1246 = vweird.f32 %v1240
    %vm1247 = vmor %vm1245, %vm1246
    %v1248 = vsel %vm1247, %v1240, %v1244
    %v1249 = vand.u32 2147483647, %v1239
    %vm1250 = vcmp.eq.f32.partialorder %v1249, 8.507059e+37
    %v1251 = vand.u32 %v1239, 2147483648
    %v1252 = vor.u32 1.1754944e-38, %v1251
    %v1253 = vsel %vm1250, %v1252, %v1248
    %v1254 = vmul.f32 1.0, %v1253
    %v1255 = vtanh.pop %v1235
    %v1256 = vmul.f32 %v1254, %v1202
    %1258 = vrot.lane.b32.xlu0 %v1255, 32
    %v1259 = vpop.permute.xlu0 %1258
    %v1261 = vmul.f32 %v1254, %v1259
    %1263 = vrot.lane.b32.xlu0 %v1261, 32
    %v1264 = vpop.permute.xlu0 %1263
    %v1266 = vadd.f32 %v1256, %v1264
    %v1267 = vtanh.pop %v1266
    %1269 = vrot.lane.b32.xlu0 %v1267, 32
    %v1270 = vpop.permute.xlu0 %1269
    %v1272 = vmul.f32 %v1254, %v1270
    %v1273 = vld [vmem:[%s668] sm:$0x3]
    %1275 = vrot.lane.b32.xlu0 %v1272, 64
    %v1276 = vpop.permute.xlu0 %1275
    %v1277 = vsel %vm192, %v1276, 0
    %1279 = vmatpush.msra.mxu0 0.0
    %1280 = vmatpush.msra.mxu0 0.0
    %1281 = vmatpush.msra.mxu0 0.0
    %1282 = vmatpush.msra.mxu0 0.0
    %1283 = vmatpush.msra.mxu0 0.0
    %1284 = vmatpush.msra.mxu0 0.0
    %1285 = vmatpush.msra.mxu0 0.0
    %1286 = vmatpush.msra.mxu0 0.0
    %1287 = vmatpush.msra.mxu0 0.0
    %1288 = vmatpush.msra.mxu0 0.0
    %1289 = vmatpush.msra.mxu0 0.0
    %1290 = vmatpush.msra.mxu0 0.0
    %1291 = vmatpush.msra.mxu0 %v743
    %1292 = vmatpush.msra.mxu0 %v742
    %1293 = vmatpush.msra.mxu0 %v741
    %1294 = vmatpush.msra.mxu0 %v740
    %1295 = vmatmul.f32.gmra.mxu0 %v1277
    %v1296 = vpop.f32.mrf.mxu0
    %v1297 = vadd.f32 0.0, %v1296
    %1298 = vdwg.mxu0
    %v1299 = vadd.f32 %v1273, %v1297
    %v1300 = vxor.u32 %v1299, 2147483648
    %v1301 = vmul.f32 %v1300, 1.442695
    %v1302 = vpow.pop %v1301
    %v1303 = vadd.f32 %v1302, 1.0
    %v1304 = vrcp.pop %v1303
    %v1305 = vmul.f32 %v1303, %v1304
    %v1306 = vsub.f32 1.0, %v1305
    %v1307 = vmul.f32 %v1304, %v1306
    %v1308 = vadd.f32 %v1304, %v1307
    %vm1309 = vweird.f32 %v1303
    %vm1310 = vweird.f32 %v1304
    %vm1311 = vmor %vm1309, %vm1310
    %v1312 = vsel %vm1311, %v1304, %v1308
    %v1313 = vand.u32 2147483647, %v1303
    %vm1314 = vcmp.eq.f32.partialorder %v1313, 8.507059e+37
    %v1315 = vand.u32 %v1303, 2147483648
    %v1316 = vor.u32 1.1754944e-38, %v1315
    %v1317 = vsel %vm1314, %v1316, %v1312
    %v1318 = vmul.f32 1.0, %v1317
    %v1319 = vtanh.pop %v1299
    %v1320 = vmul.f32 %v1318, %v1266
    %1322 = vrot.lane.b32.xlu0 %v1319, 32
    %v1323 = vpop.permute.xlu0 %1322
    %v1325 = vmul.f32 %v1318, %v1323
    %1327 = vrot.lane.b32.xlu0 %v1325, 32
    %v1328 = vpop.permute.xlu0 %1327
    %v1330 = vadd.f32 %v1320, %v1328
    %v1331 = vtanh.pop %v1330
    %1333 = vrot.lane.b32.xlu0 %v1331, 32
    %v1334 = vpop.permute.xlu0 %1333
    %v1336 = vmul.f32 %v1318, %v1334
    %v1337 = vld [vmem:[#allocation13] sm:$0xff]
    %v1338 = vld [vmem:[#allocation13 + $0x8] sm:$0xff]
    %v1339 = vld [vmem:[#allocation13 + $0x10] sm:$0xff]
    %v1340 = vld [vmem:[#allocation13 + $0x18] sm:$0xff]
    %v1341 = vld [vmem:[%s8] sm:$0x1]
    %1343 = vrot.lane.b32.xlu0 %v1336, 64
    %v1344 = vpop.permute.xlu0 %1343
    %v1345 = vsel %vm192, %v1344, 0
    %1347 = vmatpush.msra.mxu0 0.0
    %1348 = vmatpush.msra.mxu0 0.0
    %1349 = vmatpush.msra.mxu0 0.0
    %1350 = vmatpush.msra.mxu0 0.0
    %1351 = vmatpush.msra.mxu0 0.0
    %1352 = vmatpush.msra.mxu0 0.0
    %1353 = vmatpush.msra.mxu0 0.0
    %1354 = vmatpush.msra.mxu0 0.0
    %1355 = vmatpush.msra.mxu0 0.0
    %1356 = vmatpush.msra.mxu0 0.0
    %1357 = vmatpush.msra.mxu0 0.0
    %1358 = vmatpush.msra.mxu0 0.0
    %1359 = vmatpush.msra.mxu0 %v1340
    %1360 = vmatpush.msra.mxu0 %v1339
    %1361 = vmatpush.msra.mxu0 %v1338
    %1362 = vmatpush.msra.mxu0 %v1337
    %1363 = vmatmul.f32.gmra.mxu0 %v1345
    %v1364 = vpop.f32.mrf.mxu0
    %v1365 = vadd.f32 %v1341, %v1364
    %1366 = vdwg.mxu0
    %v1367 = vxor.u32 %v1365, 2147483648
    %v1368 = vmul.f32 %v1367, 1.442695
    %v1369 = vpow.pop %v1368
    %v1370 = vadd.f32 %v1369, 1.0
    %v1371 = vrcp.pop %v1370
    %v1372 = vmul.f32 %v1370, %v1371
    %v1373 = vsub.f32 1.0, %v1372
    %v1374 = vmul.f32 %v1371, %v1373
    %v1375 = vadd.f32 %v1371, %v1374
    %vm1376 = vweird.f32 %v1370
    %vm1377 = vweird.f32 %v1371
    %vm1378 = vmor %vm1376, %vm1377
    %v1379 = vsel %vm1378, %v1371, %v1375
    %v1380 = vand.u32 2147483647, %v1370
    %vm1381 = vcmp.eq.f32.partialorder %v1380, 8.507059e+37
    %v1382 = vand.u32 %v1370, 2147483648
    %v1383 = vor.u32 1.1754944e-38, %v1382
    %v1384 = vsel %vm1381, %v1383, %v1379
    %v1385 = vmul.f32 1.0, %v1384
    %1386 = vst [vmem:[#allocation15] sm:$0x1] %v1385
    // Predicated region
    $region62: #{tpu_custom_call.1} parent=1 // pred_check
      _
    $region63: #{tpu_custom_call.1} parent=1 // pred_check_branch
      %1388 = sbr.rel (0) target = $region65
    $region64: #{tpu_custom_call.1} parent=1 // pred_region
      %1390 = vsyncadd [#allocation6], 0
      %s1392 = sshll.u32 [#allocation15], 4
      %s1393 = int_to_ptr.vmem [resolvable:$true] %s1392
      %s1394 = sshll.u32 %s9, 4
      %s1395 = int_to_ptr.hbm [resolvable:$true] %s1394
      %1397 = dma.vmem_to_hbm [thread:$0]  %s1393, 16, %s1395, [#allocation6]
    $region65: #{tpu_custom_call.1} parent=1 // pred_fallthru
      _
    // Predicated region
    $region66: #{tpu_custom_call.1} parent=1 // pred_check
      _
    $region67: #{tpu_custom_call.1} parent=1 // pred_check_branch
      %1399 = sbr.rel (0) target = $region69
    $region68: #{tpu_custom_call.1} parent=1 // pred_region
      %1401 = dma.done [#allocation6], 16
    $region69: #{tpu_custom_call.1} parent=1 // pred_fallthru
      _
    %1402 = vsyncpa [#allocation5], 1
    %1403 = vsyncpa [#allocation8], 1
    %1404 = vsyncpa [#allocation11], 1
    %1405 = vsyncpa [#allocation14], 1
    %1406 = vsyncpa [#allocation6], 1

</llo_original>
